<compile_context>
chip_gen: v5e
topology: v5e:2x2
jax: 0.10.0
libtpu: 0.0.40
codegen_flags: <defaults>
</compile_context>

<pallas_src>
import functools

import jax
import jax.numpy as jnp
from jax.experimental import pallas as pl
from jax.experimental.pallas import tpu as pltpu


# ----------------------------- in-kernel helpers -----------------------------
def _gelu(x):
    # TODO(synk): tanh-approximate GELU (EUP-friendly); torch's default exact
    # erf GELU differs by <~1e-3 absolute.
    c = jnp.float32(0.7978845608028654)  # sqrt(2/pi)
    return 0.5 * x * (1.0 + jnp.tanh(c * (x + 0.044715 * (x * x * x))))


# ------------------------------ fused Pallas kernel ---------------------------
def _critic_block_kernel(
    # gridded (per batch-tile) inputs
    x_ref, gum_ref,
    # replicated stacked operands
    enc_w_ref, bn_ref, gath_ref, gathT_ref,
    gw_ref, gb_ref, vh_ref,
    ahat_ref, w1_ref, m2_ref, rnode_ref,
    # output
    o_ref,
    *, H, tau):
    f32 = jnp.float32
    bf16 = jnp.bfloat16

    # ---- encoder: Linear -> BatchNorm1d(node, eval affine) -> GELU ---------
    x = x_ref[0]                                                  # (TB*N, K)
    h = jnp.dot(x.astype(bf16), enc_w_ref[...],
                preferred_element_type=f32) + vh_ref[0]           # (TB*N, H)
    h = h * bn_ref[0] + bn_ref[1]
    h = _gelu(h)

    # ---- gather edge endpoints (exact f32 one-hot matmuls) -----------------
    gsrc = gath_ref[0]                                            # (TB*E, TB*N)
    h_src = jnp.dot(gsrc, h, preferred_element_type=f32)          # (TB*E, H)
    h_tgt = jnp.dot(gath_ref[1], h, preferred_element_type=f32)
    h_src_bf = h_src.astype(bf16)                                 # hoisted casts
    h_tgt_bf = h_tgt.astype(bf16)

    # ---- 2-layer bidirectional GRU over T=2 (t0 = target, t1 = source) -----
    # Fused-gate cells: one (M, Din)@(Din, 3H) MXU push per input part.
    def cell(x_parts, wih_ids, bih, whh_id, bhh, hprev):
        gi = bih                                                  # (1, 3H)
        for xp, wi in zip(x_parts, wih_ids):
            gi = gi + jnp.dot(xp, gw_ref[wi], preferred_element_type=f32)
        if hprev is None:
            gh = bhh
        else:
            gh = jnp.dot(hprev[1], gw_ref[whh_id],
                         preferred_element_type=f32) + bhh
        r = jax.nn.sigmoid(gi[:, :H] + gh[:, :H])
        z = jax.nn.sigmoid(gi[:, H:2 * H] + gh[:, H:2 * H])
        n = jnp.tanh(gi[:, 2 * H:] + r * gh[:, 2 * H:])
        out = (1.0 - z) * n
        if hprev is not None:
            out = out + z * hprev[0]
        return out

    # layer 0 forward / backward
    f0_t0 = cell([h_tgt_bf], [0], gb_ref[0], 1, gb_ref[1], None)
    f0_t0_bf = f0_t0.astype(bf16)
    f0_t1 = cell([h_src_bf], [0], gb_ref[0], 1, gb_ref[1], (f0_t0, f0_t0_bf))
    f0_t1_bf = f0_t1.astype(bf16)
    b0_t1 = cell([h_src_bf], [2], gb_ref[2], 3, gb_ref[3], None)
    b0_t1_bf = b0_t1.astype(bf16)
    b0_t0 = cell([h_tgt_bf], [2], gb_ref[2], 3, gb_ref[3], (b0_t1, b0_t1_bf))
    b0_t0_bf = b0_t0.astype(bf16)
    # layer 1; input at time t is [fwd_out_t, bwd_out_t] (split weights, no concat)
    f1_t0 = cell([f0_t0_bf, b0_t0_bf], [4, 5], gb_ref[4], 6, gb_ref[5], None)
    b1_t1 = cell([f0_t1_bf, b0_t1_bf], [7, 8], gb_ref[6], 9, gb_ref[7], None)
    b1_t1_bf = b1_t1.astype(bf16)
    b1_t0 = cell([f0_t0_bf, b0_t0_bf], [7, 8], gb_ref[6], 9, gb_ref[7],
                 (b1_t1, b1_t1_bf))

    # ---- rnn_connect: Linear(2H -> 1) + GELU (lane reduce; bias folded/H) ---
    logit = jnp.sum(f1_t0 * vh_ref[1] + b1_t0 * vh_ref[2] + vh_ref[4],
                    axis=1, keepdims=True)                        # (TB*E, 1)
    logit = _gelu(logit)

    # ---- per-source grouped softmax * gumbel-softmax (tau, soft) -----------
    neg = jnp.float32(-1e30)
    gsrcT = gathT_ref[0]                                          # (TB*N, TB*E)

    def grouped_softmax(lg):                                      # lg: (TB*E, 1)
        masked = jnp.where(gsrc > 0, lg, neg)                     # (TB*E, TB*N)
        gmax = jnp.max(masked, axis=0, keepdims=True)             # (1, TB*N)
        emax = jnp.sum(gsrc * gmax, axis=1, keepdims=True)        # (TB*E, 1)
        ex = jnp.exp(lg - emax)
        gsum = jnp.dot(gsrcT, ex, preferred_element_type=f32)     # (TB*N, 1)
        esum = jnp.dot(gsrc, gsum, preferred_element_type=f32)    # (TB*E, 1)
        return ex * pl.reciprocal(esum, approx=True)

    soft = grouped_softmax(logit)
    gumb = grouped_softmax((logit + gum_ref[0]) * jnp.float32(1.0 / tau))
    w_rows = soft * gumb                                          # (TB*E, 1)

    # ---- weighted scatter-add onto target nodes ----------------------------
    att = jnp.dot(gathT_ref[1], w_rows * h_src,
                  preferred_element_type=f32)                     # (TB*N, H)

    # ---- GCN layer 1 + (layer 2 + node-sum) collapsed -----------------------
    aw = jnp.dot(att.astype(bf16), w1_ref[...], preferred_element_type=f32)
    ag = jnp.dot(ahat_ref[...], aw.astype(bf16), preferred_element_type=f32)
    g1 = _gelu(ag + vh_ref[3])                                    # (TB*N, H)
    s_rows = jnp.sum(g1 * m2_ref[...] + vh_ref[5],
                     axis=1, keepdims=True)                       # (TB*N, 1)
    q = jnp.dot(rnode_ref[...], s_rows, preferred_element_type=f32)  # (TB, 1)
    o_ref[...] = q[None]                                          # (1, TB, 1)


# ------------------------------- model (glue) --------------------------------
def uniform_init(key, shape, bound):
    return jax.random.uniform(key, shape, jnp.float32, minval=-bound, maxval=bound)


def init_params(key, S, A, H, N):
    keys = jax.random.split(key, 24)
    ki = iter(keys)
    p = {}
    # Critic.encoder: Linear(S+A -> H)
    b = 1.0 / (S + A) ** 0.5
    p["enc_w"] = uniform_init(next(ki), (H, S + A), b)      # torch (out, in)
    p["enc_b"] = uniform_init(next(ki), (H,), b)
    # BatchNorm1d(node_nums), eval mode (running stats)
    p["bn_weight"] = jnp.ones((N,), jnp.float32)
    p["bn_bias"] = jnp.zeros((N,), jnp.float32)
    p["bn_mean"] = jnp.zeros((N,), jnp.float32)
    p["bn_var"] = jnp.ones((N,), jnp.float32)
    # GRU: 2 layers, bidirectional, hidden=H (layer-1 input = 2H), torch layout
    hb = 1.0 / H ** 0.5
    gru = {}
    for name, din in (("l0_f", H), ("l0_b", H), ("l1_f", 2 * H), ("l1_b", 2 * H)):
        gru[name] = dict(
            wih=uniform_init(next(ki), (3 * H, din), hb),
            whh=uniform_init(next(ki), (3 * H, H), hb),
            bih=uniform_init(next(ki), (3 * H,), hb),
            bhh=uniform_init(next(ki), (3 * H,), hb),
        )
    p["gru"] = gru
    # rnn_connect: Linear(2H -> 1) (+GELU)
    cb = 1.0 / (2 * H) ** 0.5
    p["conn_w"] = uniform_init(next(ki), (1, 2 * H), cb)
    p["conn_b"] = uniform_init(next(ki), (1,), cb)
    # TODO(synk): GCN class is not provided in the source; using a standard
    # 2-layer symmetric-normalized GCN (H -> H -> 1) with GELU in between.
    gb = 1.0 / H ** 0.5
    p["gcn_w1"] = uniform_init(next(ki), (H, H), gb)
    p["gcn_b1"] = uniform_init(next(ki), (H,), gb)
    p["gcn_w2"] = uniform_init(next(ki), (H, 1), gb)
    p["gcn_b2"] = uniform_init(next(ki), (1,), gb)
    return p


@functools.partial(jax.jit, static_argnames=("batch_tile",))
def ga_ac_forward(params, observation, actions, edge_index, gumbel_noise,
                  batch_tile=8):
    """GA_AC.forward -> Critic(observation, actions, edge_index)  (eval mode)."""
    f32, bf16 = jnp.float32, jnp.bfloat16
    B, N, S = observation.shape
    A = actions.shape[-1]
    H = params["enc_b"].shape[0]
    K = S + A
    tgt, src = edge_index[0], edge_index[1]
    E = src.shape[0]

    TB = max(1, min(batch_tile, B))
    nb = -(-B // TB)                      # ceil(B / TB)
    B_pad = nb * TB
    TBN, TBE = TB * N, TB * E

    # ---- gridded (per-tile) operands ----------------------------------------
    x = jnp.concatenate([observation, actions], axis=-1).astype(f32)  # (B,N,K)
    x = jnp.pad(x, ((0, B_pad - B), (0, 0), (0, 0))).reshape(nb, TBN, K)
    gum = jnp.pad(gumbel_noise.astype(f32), ((0, B_pad - B), (0, 0)))
    gum = gum.reshape(nb, TBE, 1)

    # ---- encoder weights; eval BatchNorm1d(node) folded to per-row affine ---
    enc_w = params["enc_w"].T.astype(bf16)                             # (K, H)
    scale = params["bn_weight"] / jnp.sqrt(params["bn_var"] + 1e-5)
    shift = params["bn_bias"] - params["bn_mean"] * scale
    bn = jnp.stack([jnp.tile(scale, TB)[:, None],
                    jnp.tile(shift, TB)[:, None]])                     # (2,TBN,1)

    # ---- block-diagonal one-hot gather/scatter constants (tile-sized;
    #      total gather/scatter work is linear in B) --------------------------
    r = jnp.arange(TBE)
    tb_i, e_i = r // E, r % E
    cols = jnp.arange(TBN)[None, :]
    gsrc = ((tb_i * N + src[e_i])[:, None] == cols).astype(f32)        # (TBE,TBN)
    gtgt = ((tb_i * N + tgt[e_i])[:, None] == cols).astype(f32)
    gath = jnp.stack([gsrc, gtgt])                                     # (2,TBE,TBN)
    gathT = jnp.stack([gsrc.T, gtgt.T])                                # (2,TBN,TBE)

    # ---- GRU weights: stacked (10, H, 3H) bf16 (torch (3H,Din) -> (Din,3H)) -
    g = params["gru"]
    wt = lambda w: w.T.astype(bf16)
    w1f = g["l1_f"]["wih"].T                                           # (2H, 3H)
    w1b = g["l1_b"]["wih"].T
    gw = jnp.stack([
        wt(g["l0_f"]["wih"]), wt(g["l0_f"]["whh"]),
        wt(g["l0_b"]["wih"]), wt(g["l0_b"]["whh"]),
        w1f[:H].astype(bf16), w1f[H:].astype(bf16), wt(g["l1_f"]["whh"]),
        w1b[:H].astype(bf16), w1b[H:].astype(bf16), wt(g["l1_b"]["whh"]),
    ])                                                                  # (10,H,3H)
    gbias = jnp.stack([
        g["l0_f"]["bih"][None, :], g["l0_f"]["bhh"][None, :],
        g["l0_b"]["bih"][None, :], g["l0_b"]["bhh"][None, :],
        g["l1_f"]["bih"][None, :], g["l1_f"]["bhh"][None, :],
        g["l1_b"]["bih"][None, :], g["l1_b"]["bhh"][None, :],
    ])                                                                  # (8,1,3H)

    # ---- H-wide row vectors: [enc_b, conn_wf, conn_wb, gcn_b1,
    #      conn_b/H (folded), gcn_b2/H (folded)] ------------------------------
    conn_b_lane = jnp.full((1, H), params["conn_b"][0] / H, f32)
    b2_lane = jnp.full((1, H), params["gcn_b2"][0] / H, f32)
    vh = jnp.stack([params["enc_b"][None, :],
                    params["conn_w"][:, :H],
                    params["conn_w"][:, H:],
                    params["gcn_b1"][None, :],
                    conn_b_lane, b2_lane])                              # (6,1,H)

    # ---- GCN constants -------------------------------------------------------
    a = jnp.zeros((N, N), f32).at[tgt, src].set(1.0)
    a = jnp.maximum(a, jnp.eye(N, dtype=f32))            # ensure self loops
    dis = 1.0 / jnp.sqrt(jnp.sum(a, axis=1))
    a_hat = a * dis[:, None] * dis[None, :]
    ahat_blk = jnp.kron(jnp.eye(TB, dtype=f32), a_hat).astype(bf16)     # (TBN,TBN)
    gcn_w1 = params["gcn_w1"].astype(bf16)                              # (H, H)
    rvec = jnp.sum(a_hat, axis=0)                                       # 1^T A-hat
    m2 = jnp.tile(rvec[:, None] * params["gcn_w2"].T, (TB, 1))          # (TBN, H)
    rnode = (jnp.arange(TBN)[None, :] // N
             == jnp.arange(TB)[:, None]).astype(f32)                    # (TB, TBN)

    # ---- Pallas call: one fused kernel, batch-tiled "parallel" grid ---------
    rep2 = lambda shape: pl.BlockSpec(shape, lambda i: (0, 0))
    rep3 = lambda shape: pl.BlockSpec(shape, lambda i: (0, 0, 0))
    H3 = 3 * H

    flops = nb * (2 * TBN * K * H + 4 * TBE * TBN * H
                  + 13 * 2 * TBE * H * H3 + 8 * TBE * TBN
                  + 2 * TBN * TBE * H + 2 * TBN * H * H
                  + 2 * TBN * TBN * H + 2 * TB * TBN)
    transcendentals = nb * (2 * TBN * H + 21 * TBE * H + 6 * TBE)
    bytes_accessed = ((x.size + gum.size + bn.size + gath.size + gathT.size
                       + gbias.size + vh.size + m2.size + rnode.size) * 4
                      + (enc_w.size + gw.size + ahat_blk.size + gcn_w1.size) * 2
                      + B_pad * 4)

    out = pl.pallas_call(
        functools.partial(_critic_block_kernel, H=H, tau=0.1),
        out_shape=jax.ShapeDtypeStruct((nb, TB, 1), f32),
        grid=(nb,),
        in_specs=[
            pl.BlockSpec((1, TBN, K), lambda i: (i, 0, 0)),   # x tile
            pl.BlockSpec((1, TBE, 1), lambda i: (i, 0, 0)),   # gumbel tile
            rep2((K, H)),                                     # enc_w
            rep3((2, TBN, 1)),                                # bn affine
            rep3((2, TBE, TBN)),                              # gather one-hots
            rep3((2, TBN, TBE)),                              # their transposes
            rep3((10, H, H3)),                                # GRU weights
            rep3((8, 1, H3)),                                 # GRU biases
            rep3((6, 1, H)),                                  # H-row vectors
            rep2((TBN, TBN)),                                 # block-diag A-hat
            rep2((H, H)),                                     # GCN W1
            rep2((TBN, H)),                                   # rvec x w2 outer
            rep2((TB, TBN)),                                  # per-batch row sum
        ],
        out_specs=pl.BlockSpec((1, TB, 1), lambda i: (i, 0, 0)),
        compiler_params=pltpu.CompilerParams(
            dimension_semantics=("parallel",),
            vmem_limit_bytes=32 * 1024 * 1024),
        cost_estimate=pl.CostEstimate(flops=flops,
                                      transcendentals=transcendentals,
                                      bytes_accessed=bytes_accessed),
    )(x, gum, enc_w, bn, gath, gathT, gw, gbias, vh,
      ahat_blk, gcn_w1, m2, rnode)

    return out.reshape(B_pad)[:B]                                       # (B,)


if __name__ == "__main__":
    B, N, S, H = 2, 4, 6, 32
    freedom_nums = [3, 3, 3]
    A = sum(freedom_nums)

    key = jax.random.PRNGKey(0)
    k_param, k_obs, k_act, k_gumbel = jax.random.split(key, 4)
    params = init_params(k_param, S, A, H, N)

    observation = jax.random.normal(k_obs, (B, N, S), jnp.float32)
    # torch.stack(actions, dim=1).view(B, N, -1) -> (B, N, sum(freedom_nums))
    actions = jax.random.uniform(k_act, (B, N, A), jnp.float32)

    # graph: ring of N nodes (both directions) + self loops; row0=target, row1=source
    tgt_l, src_l = [], []
    for i in range(N):
        for j in (i, (i + 1) % N, (i - 1) % N):
            tgt_l.append(i)
            src_l.append(j)
    edge_index = jnp.array([tgt_l, src_l], dtype=jnp.int32)
    E = edge_index.shape[1]

    # TODO(synk): gumbel_softmax noise is sampled with a fixed JAX key; it cannot
    # bit-match torch's internal RNG. All Dropout layers are eval-mode (identity).
    gumbel_noise = jax.random.gumbel(k_gumbel, (B, E), jnp.float32)

    q_values = ga_ac_forward(params, observation, actions, edge_index, gumbel_noise)
    q_values = jax.block_until_ready(q_values)
    assert q_values.shape == (B,)
    assert bool(jnp.all(jnp.isfinite(q_values)))
    print("KERNEL_OK")
</pallas_src>

<mosaic_0001>
module attributes {stable_mosaic.version = 11 : i64} {
  func.func @_critic_block_kernel(%arg0: i32, %arg1: memref<1x8x15xf32, #tpu.memory_space<vmem>>, %arg2: memref<1x24x1xf32, #tpu.memory_space<vmem>>, %arg3: memref<15x32xbf16, #tpu.memory_space<vmem>>, %arg4: memref<2x8x1xf32, #tpu.memory_space<vmem>>, %arg5: memref<2x24x8xf32, #tpu.memory_space<vmem>>, %arg6: memref<2x8x24xf32, #tpu.memory_space<vmem>>, %arg7: memref<10x32x96xbf16, #tpu.memory_space<vmem>>, %arg8: memref<8x1x96xf32, #tpu.memory_space<vmem>>, %arg9: memref<6x1x32xf32, #tpu.memory_space<vmem>>, %arg10: memref<8x8xbf16, #tpu.memory_space<vmem>>, %arg11: memref<32x32xbf16, #tpu.memory_space<vmem>>, %arg12: memref<8x32xf32, #tpu.memory_space<vmem>>, %arg13: memref<2x8xf32, #tpu.memory_space<vmem>>, %arg14: memref<1x2x1xf32, #tpu.memory_space<vmem>>) attributes {dimension_semantics = [#tpu.dimension_semantics<parallel>], iteration_bounds = array<i64: 1>, scalar_prefetch = 0 : i64, scratch_operands = 0 : i64, tpu.core_type = #tpu.core_type<tc>, window_params = [{transform_indices = @transform_0, window_bounds = array<i64: 1, 8, 15>}, {transform_indices = @transform_1, window_bounds = array<i64: 1, 24, 1>}, {pipeline_mode = #tpu.pipeline_mode<synchronous>, transform_indices = @transform_2, window_bounds = array<i64: 15, 32>}, {pipeline_mode = #tpu.pipeline_mode<synchronous>, transform_indices = @transform_3, window_bounds = array<i64: 2, 8, 1>}, {pipeline_mode = #tpu.pipeline_mode<synchronous>, transform_indices = @transform_4, window_bounds = array<i64: 2, 24, 8>}, {pipeline_mode = #tpu.pipeline_mode<synchronous>, transform_indices = @transform_5, window_bounds = array<i64: 2, 8, 24>}, {pipeline_mode = #tpu.pipeline_mode<synchronous>, transform_indices = @transform_6, window_bounds = array<i64: 10, 32, 96>}, {pipeline_mode = #tpu.pipeline_mode<synchronous>, transform_indices = @transform_7, window_bounds = array<i64: 8, 1, 96>}, {pipeline_mode = #tpu.pipeline_mode<synchronous>, transform_indices = @transform_8, window_bounds = array<i64: 6, 1, 32>}, {pipeline_mode = #tpu.pipeline_mode<synchronous>, transform_indices = @transform_9, window_bounds = array<i64: 8, 8>}, {pipeline_mode = #tpu.pipeline_mode<synchronous>, transform_indices = @transform_10, window_bounds = array<i64: 32, 32>}, {pipeline_mode = #tpu.pipeline_mode<synchronous>, transform_indices = @transform_11, window_bounds = array<i64: 8, 32>}, {pipeline_mode = #tpu.pipeline_mode<synchronous>, transform_indices = @transform_12, window_bounds = array<i64: 2, 8>}, {transform_indices = @transform_13, window_bounds = array<i64: 1, 2, 1>}]} {
    %c0 = arith.constant 0 : index
    %c0_0 = arith.constant 0 : index
    %c0_1 = arith.constant 0 : index
    %0 = vector.load %arg1[%c0, %c0_0, %c0_1] : memref<1x8x15xf32, #tpu.memory_space<vmem>>, vector<1x8x15xf32>
    %1 = vector.shape_cast %0 : vector<1x8x15xf32> to vector<8x15xf32>
    %2 = arith.truncf %1 : vector<8x15xf32> to vector<8x15xbf16>
    %c0_2 = arith.constant 0 : index
    %c0_3 = arith.constant 0 : index
    %3 = vector.load %arg3[%c0_2, %c0_3] : memref<15x32xbf16, #tpu.memory_space<vmem>>, vector<15x32xbf16>
    %cst = arith.constant dense<0.000000e+00> : vector<8x32xf32>
    %4 = tpu.matmul %2, %3, %cst {dimension_numbers = #tpu.dot_dimension_numbers<[1], [0], [0], [1], [0, 0, 1, 1], [], []>} : vector<8x15xbf16>, vector<15x32xbf16>, vector<8x32xf32> -> vector<8x32xf32>
    %c0_4 = arith.constant 0 : index
    %c0_5 = arith.constant 0 : index
    %c0_6 = arith.constant 0 : index
    %5 = vector.load %arg9[%c0_4, %c0_5, %c0_6] : memref<6x1x32xf32, #tpu.memory_space<vmem>>, vector<1x1x32xf32>
    %6 = vector.shape_cast %5 : vector<1x1x32xf32> to vector<1x32xf32>
    %7 = vector.broadcast %6 : vector<1x32xf32> to vector<8x32xf32>
    %8 = arith.addf %4, %7 : vector<8x32xf32>
    %c0_7 = arith.constant 0 : index
    %c0_8 = arith.constant 0 : index
    %c0_9 = arith.constant 0 : index
    %9 = vector.load %arg4[%c0_7, %c0_8, %c0_9] : memref<2x8x1xf32, #tpu.memory_space<vmem>>, vector<1x8x1xf32>
    %10 = vector.shape_cast %9 : vector<1x8x1xf32> to vector<8x1xf32>
    %11 = vector.broadcast %10 : vector<8x1xf32> to vector<8x32xf32>
    %12 = arith.mulf %8, %11 : vector<8x32xf32>
    %c1 = arith.constant 1 : index
    %c0_10 = arith.constant 0 : index
    %c0_11 = arith.constant 0 : index
    %13 = vector.load %arg4[%c1, %c0_10, %c0_11] : memref<2x8x1xf32, #tpu.memory_space<vmem>>, vector<1x8x1xf32>
    %14 = vector.shape_cast %13 : vector<1x8x1xf32> to vector<8x1xf32>
    %15 = vector.broadcast %14 : vector<8x1xf32> to vector<8x32xf32>
    %16 = arith.addf %12, %15 : vector<8x32xf32>
    %cst_12 = arith.constant 5.000000e-01 : f32
    %17 = vector.broadcast %cst_12 : f32 to vector<8x32xf32>
    %18 = arith.mulf %17, %16 : vector<8x32xf32>
    %19 = arith.mulf %16, %16 : vector<8x32xf32>
    %20 = arith.mulf %19, %16 : vector<8x32xf32>
    %cst_13 = arith.constant 4.471500e-02 : f32
    %21 = vector.broadcast %cst_13 : f32 to vector<8x32xf32>
    %22 = arith.mulf %21, %20 : vector<8x32xf32>
    %23 = arith.addf %16, %22 : vector<8x32xf32>
    %cst_14 = arith.constant 0.797884583 : f32
    %24 = vector.broadcast %cst_14 : f32 to vector<8x32xf32>
    %25 = arith.mulf %24, %23 : vector<8x32xf32>
    %26 = math.tanh %25 : vector<8x32xf32>
    %cst_15 = arith.constant 1.000000e+00 : f32
    %27 = vector.broadcast %cst_15 : f32 to vector<8x32xf32>
    %28 = arith.addf %27, %26 : vector<8x32xf32>
    %29 = arith.mulf %18, %28 : vector<8x32xf32>
    %c0_16 = arith.constant 0 : index
    %c0_17 = arith.constant 0 : index
    %c0_18 = arith.constant 0 : index
    %30 = vector.load %arg5[%c0_16, %c0_17, %c0_18] : memref<2x24x8xf32, #tpu.memory_space<vmem>>, vector<1x24x8xf32>
    %31 = vector.shape_cast %30 : vector<1x24x8xf32> to vector<24x8xf32>
    %cst_19 = arith.constant dense<0.000000e+00> : vector<24x32xf32>
    %32 = tpu.matmul %31, %29, %cst_19 {dimension_numbers = #tpu.dot_dimension_numbers<[1], [0], [0], [1], [0, 0, 1, 1], [], []>} : vector<24x8xf32>, vector<8x32xf32>, vector<24x32xf32> -> vector<24x32xf32>
    %c1_20 = arith.constant 1 : index
    %c0_21 = arith.constant 0 : index
    %c0_22 = arith.constant 0 : index
    %33 = vector.load %arg5[%c1_20, %c0_21, %c0_22] : memref<2x24x8xf32, #tpu.memory_space<vmem>>, vector<1x24x8xf32>
    %34 = vector.shape_cast %33 : vector<1x24x8xf32> to vector<24x8xf32>
    %cst_23 = arith.constant dense<0.000000e+00> : vector<24x32xf32>
    %35 = tpu.matmul %34, %29, %cst_23 {dimension_numbers = #tpu.dot_dimension_numbers<[1], [0], [0], [1], [0, 0, 1, 1], [], []>} : vector<24x8xf32>, vector<8x32xf32>, vector<24x32xf32> -> vector<24x32xf32>
    %36 = arith.truncf %32 : vector<24x32xf32> to vector<24x32xbf16>
    %37 = arith.truncf %35 : vector<24x32xf32> to vector<24x32xbf16>
    %c0_24 = arith.constant 0 : index
    %c0_25 = arith.constant 0 : index
    %c0_26 = arith.constant 0 : index
    %38 = vector.load %arg8[%c0_24, %c0_25, %c0_26] : memref<8x1x96xf32, #tpu.memory_space<vmem>>, vector<1x1x96xf32>
    %39 = vector.shape_cast %38 : vector<1x1x96xf32> to vector<1x96xf32>
    %c1_27 = arith.constant 1 : index
    %c0_28 = arith.constant 0 : index
    %c0_29 = arith.constant 0 : index
    %40 = vector.load %arg8[%c1_27, %c0_28, %c0_29] : memref<8x1x96xf32, #tpu.memory_space<vmem>>, vector<1x1x96xf32>
    %41 = vector.shape_cast %40 : vector<1x1x96xf32> to vector<1x96xf32>
    %c0_30 = arith.constant 0 : index
    %c0_31 = arith.constant 0 : index
    %c0_32 = arith.constant 0 : index
    %42 = vector.load %arg7[%c0_30, %c0_31, %c0_32] : memref<10x32x96xbf16, #tpu.memory_space<vmem>>, vector<1x32x96xbf16>
    %43 = vector.shape_cast %42 : vector<1x32x96xbf16> to vector<32x96xbf16>
    %cst_33 = arith.constant dense<0.000000e+00> : vector<24x96xf32>
    %44 = tpu.matmul %37, %43, %cst_33 {dimension_numbers = #tpu.dot_dimension_numbers<[1], [0], [0], [1], [0, 0, 1, 1], [], []>} : vector<24x32xbf16>, vector<32x96xbf16>, vector<24x96xf32> -> vector<24x96xf32>
    %45 = vector.broadcast %39 : vector<1x96xf32> to vector<24x96xf32>
    %46 = arith.addf %45, %44 : vector<24x96xf32>
    %47 = vector.extract_strided_slice %46 {offsets = [0, 0], sizes = [24, 32], strides = [1, 1]} : vector<24x96xf32> to vector<24x32xf32>
    %48 = vector.extract_strided_slice %41 {offsets = [0, 0], sizes = [1, 32], strides = [1, 1]} : vector<1x96xf32> to vector<1x32xf32>
    %49 = vector.broadcast %48 : vector<1x32xf32> to vector<24x32xf32>
    %50 = arith.addf %47, %49 : vector<24x32xf32>
    %51 = arith.negf %50 : vector<24x32xf32>
    %52 = math.exp %51 : vector<24x32xf32>
    %cst_34 = arith.constant 1.000000e+00 : f32
    %53 = vector.broadcast %cst_34 : f32 to vector<24x32xf32>
    %54 = arith.addf %53, %52 : vector<24x32xf32>
    %55 = arith.divf %53, %54 : vector<24x32xf32>
    %56 = vector.extract_strided_slice %46 {offsets = [0, 32], sizes = [24, 32], strides = [1, 1]} : vector<24x96xf32> to vector<24x32xf32>
    %57 = vector.extract_strided_slice %41 {offsets = [0, 32], sizes = [1, 32], strides = [1, 1]} : vector<1x96xf32> to vector<1x32xf32>
    %58 = vector.broadcast %57 : vector<1x32xf32> to vector<24x32xf32>
    %59 = arith.addf %56, %58 : vector<24x32xf32>
    %60 = arith.negf %59 : vector<24x32xf32>
    %61 = math.exp %60 : vector<24x32xf32>
    %cst_35 = arith.constant 1.000000e+00 : f32
    %62 = vector.broadcast %cst_35 : f32 to vector<24x32xf32>
    %63 = arith.addf %62, %61 : vector<24x32xf32>
    %64 = arith.divf %62, %63 : vector<24x32xf32>
    %65 = vector.extract_strided_slice %46 {offsets = [0, 64], sizes = [24, 32], strides = [1, 1]} : vector<24x96xf32> to vector<24x32xf32>
    %66 = vector.extract_strided_slice %41 {offsets = [0, 64], sizes = [1, 32], strides = [1, 1]} : vector<1x96xf32> to vector<1x32xf32>
    %67 = vector.broadcast %66 : vector<1x32xf32> to vector<24x32xf32>
    %68 = arith.mulf %55, %67 : vector<24x32xf32>
    %69 = arith.addf %65, %68 : vector<24x32xf32>
    %70 = math.tanh %69 : vector<24x32xf32>
    %cst_36 = arith.constant 1.000000e+00 : f32
    %71 = vector.broadcast %cst_36 : f32 to vector<24x32xf32>
    %72 = arith.subf %71, %64 : vector<24x32xf32>
    %73 = arith.mulf %72, %70 : vector<24x32xf32>
    %74 = arith.truncf %73 : vector<24x32xf32> to vector<24x32xbf16>
    %c0_37 = arith.constant 0 : index
    %c0_38 = arith.constant 0 : index
    %c0_39 = arith.constant 0 : index
    %75 = vector.load %arg8[%c0_37, %c0_38, %c0_39] : memref<8x1x96xf32, #tpu.memory_space<vmem>>, vector<1x1x96xf32>
    %76 = vector.shape_cast %75 : vector<1x1x96xf32> to vector<1x96xf32>
    %c1_40 = arith.constant 1 : index
    %c0_41 = arith.constant 0 : index
    %c0_42 = arith.constant 0 : index
    %77 = vector.load %arg8[%c1_40, %c0_41, %c0_42] : memref<8x1x96xf32, #tpu.memory_space<vmem>>, vector<1x1x96xf32>
    %78 = vector.shape_cast %77 : vector<1x1x96xf32> to vector<1x96xf32>
    %c0_43 = arith.constant 0 : index
    %c0_44 = arith.constant 0 : index
    %c0_45 = arith.constant 0 : index
    %79 = vector.load %arg7[%c0_43, %c0_44, %c0_45] : memref<10x32x96xbf16, #tpu.memory_space<vmem>>, vector<1x32x96xbf16>
    %80 = vector.shape_cast %79 : vector<1x32x96xbf16> to vector<32x96xbf16>
    %cst_46 = arith.constant dense<0.000000e+00> : vector<24x96xf32>
    %81 = tpu.matmul %36, %80, %cst_46 {dimension_numbers = #tpu.dot_dimension_numbers<[1], [0], [0], [1], [0, 0, 1, 1], [], []>} : vector<24x32xbf16>, vector<32x96xbf16>, vector<24x96xf32> -> vector<24x96xf32>
    %82 = vector.broadcast %76 : vector<1x96xf32> to vector<24x96xf32>
    %83 = arith.addf %82, %81 : vector<24x96xf32>
    %c1_47 = arith.constant 1 : index
    %c0_48 = arith.constant 0 : index
    %c0_49 = arith.constant 0 : index
    %84 = vector.load %arg7[%c1_47, %c0_48, %c0_49] : memref<10x32x96xbf16, #tpu.memory_space<vmem>>, vector<1x32x96xbf16>
    %85 = vector.shape_cast %84 : vector<1x32x96xbf16> to vector<32x96xbf16>
    %cst_50 = arith.constant dense<0.000000e+00> : vector<24x96xf32>
    %86 = tpu.matmul %74, %85, %cst_50 {dimension_numbers = #tpu.dot_dimension_numbers<[1], [0], [0], [1], [0, 0, 1, 1], [], []>} : vector<24x32xbf16>, vector<32x96xbf16>, vector<24x96xf32> -> vector<24x96xf32>
    %87 = vector.broadcast %78 : vector<1x96xf32> to vector<24x96xf32>
    %88 = arith.addf %86, %87 : vector<24x96xf32>
    %89 = vector.extract_strided_slice %83 {offsets = [0, 0], sizes = [24, 32], strides = [1, 1]} : vector<24x96xf32> to vector<24x32xf32>
    %90 = vector.extract_strided_slice %88 {offsets = [0, 0], sizes = [24, 32], strides = [1, 1]} : vector<24x96xf32> to vector<24x32xf32>
    %91 = arith.addf %89, %90 : vector<24x32xf32>
    %92 = arith.negf %91 : vector<24x32xf32>
    %93 = math.exp %92 : vector<24x32xf32>
    %cst_51 = arith.constant 1.000000e+00 : f32
    %94 = vector.broadcast %cst_51 : f32 to vector<24x32xf32>
    %95 = arith.addf %94, %93 : vector<24x32xf32>
    %96 = arith.divf %94, %95 : vector<24x32xf32>
    %97 = vector.extract_strided_slice %83 {offsets = [0, 32], sizes = [24, 32], strides = [1, 1]} : vector<24x96xf32> to vector<24x32xf32>
    %98 = vector.extract_strided_slice %88 {offsets = [0, 32], sizes = [24, 32], strides = [1, 1]} : vector<24x96xf32> to vector<24x32xf32>
    %99 = arith.addf %97, %98 : vector<24x32xf32>
    %100 = arith.negf %99 : vector<24x32xf32>
    %101 = math.exp %100 : vector<24x32xf32>
    %cst_52 = arith.constant 1.000000e+00 : f32
    %102 = vector.broadcast %cst_52 : f32 to vector<24x32xf32>
    %103 = arith.addf %102, %101 : vector<24x32xf32>
    %104 = arith.divf %102, %103 : vector<24x32xf32>
    %105 = vector.extract_strided_slice %83 {offsets = [0, 64], sizes = [24, 32], strides = [1, 1]} : vector<24x96xf32> to vector<24x32xf32>
    %106 = vector.extract_strided_slice %88 {offsets = [0, 64], sizes = [24, 32], strides = [1, 1]} : vector<24x96xf32> to vector<24x32xf32>
    %107 = arith.mulf %96, %106 : vector<24x32xf32>
    %108 = arith.addf %105, %107 : vector<24x32xf32>
    %109 = math.tanh %108 : vector<24x32xf32>
    %cst_53 = arith.constant 1.000000e+00 : f32
    %110 = vector.broadcast %cst_53 : f32 to vector<24x32xf32>
    %111 = arith.subf %110, %104 : vector<24x32xf32>
    %112 = arith.mulf %111, %109 : vector<24x32xf32>
    %113 = arith.mulf %104, %73 : vector<24x32xf32>
    %114 = arith.addf %112, %113 : vector<24x32xf32>
    %115 = arith.truncf %114 : vector<24x32xf32> to vector<24x32xbf16>
    %c2 = arith.constant 2 : index
    %c0_54 = arith.constant 0 : index
    %c0_55 = arith.constant 0 : index
    %116 = vector.load %arg8[%c2, %c0_54, %c0_55] : memref<8x1x96xf32, #tpu.memory_space<vmem>>, vector<1x1x96xf32>
    %117 = vector.shape_cast %116 : vector<1x1x96xf32> to vector<1x96xf32>
    %c3 = arith.constant 3 : index
    %c0_56 = arith.constant 0 : index
    %c0_57 = arith.constant 0 : index
    %118 = vector.load %arg8[%c3, %c0_56, %c0_57] : memref<8x1x96xf32, #tpu.memory_space<vmem>>, vector<1x1x96xf32>
    %119 = vector.shape_cast %118 : vector<1x1x96xf32> to vector<1x96xf32>
    %c2_58 = arith.constant 2 : index
    %c0_59 = arith.constant 0 : index
    %c0_60 = arith.constant 0 : index
    %120 = vector.load %arg7[%c2_58, %c0_59, %c0_60] : memref<10x32x96xbf16, #tpu.memory_space<vmem>>, vector<1x32x96xbf16>
    %121 = vector.shape_cast %120 : vector<1x32x96xbf16> to vector<32x96xbf16>
    %cst_61 = arith.constant dense<0.000000e+00> : vector<24x96xf32>
    %122 = tpu.matmul %36, %121, %cst_61 {dimension_numbers = #tpu.dot_dimension_numbers<[1], [0], [0], [1], [0, 0, 1, 1], [], []>} : vector<24x32xbf16>, vector<32x96xbf16>, vector<24x96xf32> -> vector<24x96xf32>
    %123 = vector.broadcast %117 : vector<1x96xf32> to vector<24x96xf32>
    %124 = arith.addf %123, %122 : vector<24x96xf32>
    %125 = vector.extract_strided_slice %124 {offsets = [0, 0], sizes = [24, 32], strides = [1, 1]} : vector<24x96xf32> to vector<24x32xf32>
    %126 = vector.extract_strided_slice %119 {offsets = [0, 0], sizes = [1, 32], strides = [1, 1]} : vector<1x96xf32> to vector<1x32xf32>
    %127 = vector.broadcast %126 : vector<1x32xf32> to vector<24x32xf32>
    %128 = arith.addf %125, %127 : vector<24x32xf32>
    %129 = arith.negf %128 : vector<24x32xf32>
    %130 = math.exp %129 : vector<24x32xf32>
    %cst_62 = arith.constant 1.000000e+00 : f32
    %131 = vector.broadcast %cst_62 : f32 to vector<24x32xf32>
    %132 = arith.addf %131, %130 : vector<24x32xf32>
    %133 = arith.divf %131, %132 : vector<24x32xf32>
    %134 = vector.extract_strided_slice %124 {offsets = [0, 32], sizes = [24, 32], strides = [1, 1]} : vector<24x96xf32> to vector<24x32xf32>
    %135 = vector.extract_strided_slice %119 {offsets = [0, 32], sizes = [1, 32], strides = [1, 1]} : vector<1x96xf32> to vector<1x32xf32>
    %136 = vector.broadcast %135 : vector<1x32xf32> to vector<24x32xf32>
    %137 = arith.addf %134, %136 : vector<24x32xf32>
    %138 = arith.negf %137 : vector<24x32xf32>
    %139 = math.exp %138 : vector<24x32xf32>
    %cst_63 = arith.constant 1.000000e+00 : f32
    %140 = vector.broadcast %cst_63 : f32 to vector<24x32xf32>
    %141 = arith.addf %140, %139 : vector<24x32xf32>
    %142 = arith.divf %140, %141 : vector<24x32xf32>
    %143 = vector.extract_strided_slice %124 {offsets = [0, 64], sizes = [24, 32], strides = [1, 1]} : vector<24x96xf32> to vector<24x32xf32>
    %144 = vector.extract_strided_slice %119 {offsets = [0, 64], sizes = [1, 32], strides = [1, 1]} : vector<1x96xf32> to vector<1x32xf32>
    %145 = vector.broadcast %144 : vector<1x32xf32> to vector<24x32xf32>
    %146 = arith.mulf %133, %145 : vector<24x32xf32>
    %147 = arith.addf %143, %146 : vector<24x32xf32>
    %148 = math.tanh %147 : vector<24x32xf32>
    %cst_64 = arith.constant 1.000000e+00 : f32
    %149 = vector.broadcast %cst_64 : f32 to vector<24x32xf32>
    %150 = arith.subf %149, %142 : vector<24x32xf32>
    %151 = arith.mulf %150, %148 : vector<24x32xf32>
    %152 = arith.truncf %151 : vector<24x32xf32> to vector<24x32xbf16>
    %c2_65 = arith.constant 2 : index
    %c0_66 = arith.constant 0 : index
    %c0_67 = arith.constant 0 : index
    %153 = vector.load %arg8[%c2_65, %c0_66, %c0_67] : memref<8x1x96xf32, #tpu.memory_space<vmem>>, vector<1x1x96xf32>
    %154 = vector.shape_cast %153 : vector<1x1x96xf32> to vector<1x96xf32>
    %c3_68 = arith.constant 3 : index
    %c0_69 = arith.constant 0 : index
    %c0_70 = arith.constant 0 : index
    %155 = vector.load %arg8[%c3_68, %c0_69, %c0_70] : memref<8x1x96xf32, #tpu.memory_space<vmem>>, vector<1x1x96xf32>
    %156 = vector.shape_cast %155 : vector<1x1x96xf32> to vector<1x96xf32>
    %c2_71 = arith.constant 2 : index
    %c0_72 = arith.constant 0 : index
    %c0_73 = arith.constant 0 : index
    %157 = vector.load %arg7[%c2_71, %c0_72, %c0_73] : memref<10x32x96xbf16, #tpu.memory_space<vmem>>, vector<1x32x96xbf16>
    %158 = vector.shape_cast %157 : vector<1x32x96xbf16> to vector<32x96xbf16>
    %cst_74 = arith.constant dense<0.000000e+00> : vector<24x96xf32>
    %159 = tpu.matmul %37, %158, %cst_74 {dimension_numbers = #tpu.dot_dimension_numbers<[1], [0], [0], [1], [0, 0, 1, 1], [], []>} : vector<24x32xbf16>, vector<32x96xbf16>, vector<24x96xf32> -> vector<24x96xf32>
    %160 = vector.broadcast %154 : vector<1x96xf32> to vector<24x96xf32>
    %161 = arith.addf %160, %159 : vector<24x96xf32>
    %c3_75 = arith.constant 3 : index
    %c0_76 = arith.constant 0 : index
    %c0_77 = arith.constant 0 : index
    %162 = vector.load %arg7[%c3_75, %c0_76, %c0_77] : memref<10x32x96xbf16, #tpu.memory_space<vmem>>, vector<1x32x96xbf16>
    %163 = vector.shape_cast %162 : vector<1x32x96xbf16> to vector<32x96xbf16>
    %cst_78 = arith.constant dense<0.000000e+00> : vector<24x96xf32>
    %164 = tpu.matmul %152, %163, %cst_78 {dimension_numbers = #tpu.dot_dimension_numbers<[1], [0], [0], [1], [0, 0, 1, 1], [], []>} : vector<24x32xbf16>, vector<32x96xbf16>, vector<24x96xf32> -> vector<24x96xf32>
    %165 = vector.broadcast %156 : vector<1x96xf32> to vector<24x96xf32>
    %166 = arith.addf %164, %165 : vector<24x96xf32>
    %167 = vector.extract_strided_slice %161 {offsets = [0, 0], sizes = [24, 32], strides = [1, 1]} : vector<24x96xf32> to vector<24x32xf32>
    %168 = vector.extract_strided_slice %166 {offsets = [0, 0], sizes = [24, 32], strides = [1, 1]} : vector<24x96xf32> to vector<24x32xf32>
    %169 = arith.addf %167, %168 : vector<24x32xf32>
    %170 = arith.negf %169 : vector<24x32xf32>
    %171 = math.exp %170 : vector<24x32xf32>
    %cst_79 = arith.constant 1.000000e+00 : f32
    %172 = vector.broadcast %cst_79 : f32 to vector<24x32xf32>
    %173 = arith.addf %172, %171 : vector<24x32xf32>
    %174 = arith.divf %172, %173 : vector<24x32xf32>
    %175 = vector.extract_strided_slice %161 {offsets = [0, 32], sizes = [24, 32], strides = [1, 1]} : vector<24x96xf32> to vector<24x32xf32>
    %176 = vector.extract_strided_slice %166 {offsets = [0, 32], sizes = [24, 32], strides = [1, 1]} : vector<24x96xf32> to vector<24x32xf32>
    %177 = arith.addf %175, %176 : vector<24x32xf32>
    %178 = arith.negf %177 : vector<24x32xf32>
    %179 = math.exp %178 : vector<24x32xf32>
    %cst_80 = arith.constant 1.000000e+00 : f32
    %180 = vector.broadcast %cst_80 : f32 to vector<24x32xf32>
    %181 = arith.addf %180, %179 : vector<24x32xf32>
    %182 = arith.divf %180, %181 : vector<24x32xf32>
    %183 = vector.extract_strided_slice %161 {offsets = [0, 64], sizes = [24, 32], strides = [1, 1]} : vector<24x96xf32> to vector<24x32xf32>
    %184 = vector.extract_strided_slice %166 {offsets = [0, 64], sizes = [24, 32], strides = [1, 1]} : vector<24x96xf32> to vector<24x32xf32>
    %185 = arith.mulf %174, %184 : vector<24x32xf32>
    %186 = arith.addf %183, %185 : vector<24x32xf32>
    %187 = math.tanh %186 : vector<24x32xf32>
    %cst_81 = arith.constant 1.000000e+00 : f32
    %188 = vector.broadcast %cst_81 : f32 to vector<24x32xf32>
    %189 = arith.subf %188, %182 : vector<24x32xf32>
    %190 = arith.mulf %189, %187 : vector<24x32xf32>
    %191 = arith.mulf %182, %151 : vector<24x32xf32>
    %192 = arith.addf %190, %191 : vector<24x32xf32>
    %193 = arith.truncf %192 : vector<24x32xf32> to vector<24x32xbf16>
    %c4 = arith.constant 4 : index
    %c0_82 = arith.constant 0 : index
    %c0_83 = arith.constant 0 : index
    %194 = vector.load %arg8[%c4, %c0_82, %c0_83] : memref<8x1x96xf32, #tpu.memory_space<vmem>>, vector<1x1x96xf32>
    %195 = vector.shape_cast %194 : vector<1x1x96xf32> to vector<1x96xf32>
    %c5 = arith.constant 5 : index
    %c0_84 = arith.constant 0 : index
    %c0_85 = arith.constant 0 : index
    %196 = vector.load %arg8[%c5, %c0_84, %c0_85] : memref<8x1x96xf32, #tpu.memory_space<vmem>>, vector<1x1x96xf32>
    %197 = vector.shape_cast %196 : vector<1x1x96xf32> to vector<1x96xf32>
    %c4_86 = arith.constant 4 : index
    %c0_87 = arith.constant 0 : index
    %c0_88 = arith.constant 0 : index
    %198 = vector.load %arg7[%c4_86, %c0_87, %c0_88] : memref<10x32x96xbf16, #tpu.memory_space<vmem>>, vector<1x32x96xbf16>
    %199 = vector.shape_cast %198 : vector<1x32x96xbf16> to vector<32x96xbf16>
    %cst_89 = arith.constant dense<0.000000e+00> : vector<24x96xf32>
    %200 = tpu.matmul %74, %199, %cst_89 {dimension_numbers = #tpu.dot_dimension_numbers<[1], [0], [0], [1], [0, 0, 1, 1], [], []>} : vector<24x32xbf16>, vector<32x96xbf16>, vector<24x96xf32> -> vector<24x96xf32>
    %201 = vector.broadcast %195 : vector<1x96xf32> to vector<24x96xf32>
    %202 = arith.addf %201, %200 : vector<24x96xf32>
    %c5_90 = arith.constant 5 : index
    %c0_91 = arith.constant 0 : index
    %c0_92 = arith.constant 0 : index
    %203 = vector.load %arg7[%c5_90, %c0_91, %c0_92] : memref<10x32x96xbf16, #tpu.memory_space<vmem>>, vector<1x32x96xbf16>
    %204 = vector.shape_cast %203 : vector<1x32x96xbf16> to vector<32x96xbf16>
    %cst_93 = arith.constant dense<0.000000e+00> : vector<24x96xf32>
    %205 = tpu.matmul %193, %204, %cst_93 {dimension_numbers = #tpu.dot_dimension_numbers<[1], [0], [0], [1], [0, 0, 1, 1], [], []>} : vector<24x32xbf16>, vector<32x96xbf16>, vector<24x96xf32> -> vector<24x96xf32>
    %206 = arith.addf %202, %205 : vector<24x96xf32>
    %207 = vector.extract_strided_slice %206 {offsets = [0, 0], sizes = [24, 32], strides = [1, 1]} : vector<24x96xf32> to vector<24x32xf32>
    %208 = vector.extract_strided_slice %197 {offsets = [0, 0], sizes = [1, 32], strides = [1, 1]} : vector<1x96xf32> to vector<1x32xf32>
    %209 = vector.broadcast %208 : vector<1x32xf32> to vector<24x32xf32>
    %210 = arith.addf %207, %209 : vector<24x32xf32>
    %211 = arith.negf %210 : vector<24x32xf32>
    %212 = math.exp %211 : vector<24x32xf32>
    %cst_94 = arith.constant 1.000000e+00 : f32
    %213 = vector.broadcast %cst_94 : f32 to vector<24x32xf32>
    %214 = arith.addf %213, %212 : vector<24x32xf32>
    %215 = arith.divf %213, %214 : vector<24x32xf32>
    %216 = vector.extract_strided_slice %206 {offsets = [0, 32], sizes = [24, 32], strides = [1, 1]} : vector<24x96xf32> to vector<24x32xf32>
    %217 = vector.extract_strided_slice %197 {offsets = [0, 32], sizes = [1, 32], strides = [1, 1]} : vector<1x96xf32> to vector<1x32xf32>
    %218 = vector.broadcast %217 : vector<1x32xf32> to vector<24x32xf32>
    %219 = arith.addf %216, %218 : vector<24x32xf32>
    %220 = arith.negf %219 : vector<24x32xf32>
    %221 = math.exp %220 : vector<24x32xf32>
    %cst_95 = arith.constant 1.000000e+00 : f32
    %222 = vector.broadcast %cst_95 : f32 to vector<24x32xf32>
    %223 = arith.addf %222, %221 : vector<24x32xf32>
    %224 = arith.divf %222, %223 : vector<24x32xf32>
    %225 = vector.extract_strided_slice %206 {offsets = [0, 64], sizes = [24, 32], strides = [1, 1]} : vector<24x96xf32> to vector<24x32xf32>
    %226 = vector.extract_strided_slice %197 {offsets = [0, 64], sizes = [1, 32], strides = [1, 1]} : vector<1x96xf32> to vector<1x32xf32>
    %227 = vector.broadcast %226 : vector<1x32xf32> to vector<24x32xf32>
    %228 = arith.mulf %215, %227 : vector<24x32xf32>
    %229 = arith.addf %225, %228 : vector<24x32xf32>
    %230 = math.tanh %229 : vector<24x32xf32>
    %cst_96 = arith.constant 1.000000e+00 : f32
    %231 = vector.broadcast %cst_96 : f32 to vector<24x32xf32>
    %232 = arith.subf %231, %224 : vector<24x32xf32>
    %233 = arith.mulf %232, %230 : vector<24x32xf32>
    %c6 = arith.constant 6 : index
    %c0_97 = arith.constant 0 : index
    %c0_98 = arith.constant 0 : index
    %234 = vector.load %arg8[%c6, %c0_97, %c0_98] : memref<8x1x96xf32, #tpu.memory_space<vmem>>, vector<1x1x96xf32>
    %235 = vector.shape_cast %234 : vector<1x1x96xf32> to vector<1x96xf32>
    %c7 = arith.constant 7 : index
    %c0_99 = arith.constant 0 : index
    %c0_100 = arith.constant 0 : index
    %236 = vector.load %arg8[%c7, %c0_99, %c0_100] : memref<8x1x96xf32, #tpu.memory_space<vmem>>, vector<1x1x96xf32>
    %237 = vector.shape_cast %236 : vector<1x1x96xf32> to vector<1x96xf32>
    %c7_101 = arith.constant 7 : index
    %c0_102 = arith.constant 0 : index
    %c0_103 = arith.constant 0 : index
    %238 = vector.load %arg7[%c7_101, %c0_102, %c0_103] : memref<10x32x96xbf16, #tpu.memory_space<vmem>>, vector<1x32x96xbf16>
    %239 = vector.shape_cast %238 : vector<1x32x96xbf16> to vector<32x96xbf16>
    %cst_104 = arith.constant dense<0.000000e+00> : vector<24x96xf32>
    %240 = tpu.matmul %115, %239, %cst_104 {dimension_numbers = #tpu.dot_dimension_numbers<[1], [0], [0], [1], [0, 0, 1, 1], [], []>} : vector<24x32xbf16>, vector<32x96xbf16>, vector<24x96xf32> -> vector<24x96xf32>
    %241 = vector.broadcast %235 : vector<1x96xf32> to vector<24x96xf32>
    %242 = arith.addf %241, %240 : vector<24x96xf32>
    %c8 = arith.constant 8 : index
    %c0_105 = arith.constant 0 : index
    %c0_106 = arith.constant 0 : index
    %243 = vector.load %arg7[%c8, %c0_105, %c0_106] : memref<10x32x96xbf16, #tpu.memory_space<vmem>>, vector<1x32x96xbf16>
    %244 = vector.shape_cast %243 : vector<1x32x96xbf16> to vector<32x96xbf16>
    %cst_107 = arith.constant dense<0.000000e+00> : vector<24x96xf32>
    %245 = tpu.matmul %152, %244, %cst_107 {dimension_numbers = #tpu.dot_dimension_numbers<[1], [0], [0], [1], [0, 0, 1, 1], [], []>} : vector<24x32xbf16>, vector<32x96xbf16>, vector<24x96xf32> -> vector<24x96xf32>
    %246 = arith.addf %242, %245 : vector<24x96xf32>
    %247 = vector.extract_strided_slice %246 {offsets = [0, 0], sizes = [24, 32], strides = [1, 1]} : vector<24x96xf32> to vector<24x32xf32>
    %248 = vector.extract_strided_slice %237 {offsets = [0, 0], sizes = [1, 32], strides = [1, 1]} : vector<1x96xf32> to vector<1x32xf32>
    %249 = vector.broadcast %248 : vector<1x32xf32> to vector<24x32xf32>
    %250 = arith.addf %247, %249 : vector<24x32xf32>
    %251 = arith.negf %250 : vector<24x32xf32>
    %252 = math.exp %251 : vector<24x32xf32>
    %cst_108 = arith.constant 1.000000e+00 : f32
    %253 = vector.broadcast %cst_108 : f32 to vector<24x32xf32>
    %254 = arith.addf %253, %252 : vector<24x32xf32>
    %255 = arith.divf %253, %254 : vector<24x32xf32>
    %256 = vector.extract_strided_slice %246 {offsets = [0, 32], sizes = [24, 32], strides = [1, 1]} : vector<24x96xf32> to vector<24x32xf32>
    %257 = vector.extract_strided_slice %237 {offsets = [0, 32], sizes = [1, 32], strides = [1, 1]} : vector<1x96xf32> to vector<1x32xf32>
    %258 = vector.broadcast %257 : vector<1x32xf32> to vector<24x32xf32>
    %259 = arith.addf %256, %258 : vector<24x32xf32>
    %260 = arith.negf %259 : vector<24x32xf32>
    %261 = math.exp %260 : vector<24x32xf32>
    %cst_109 = arith.constant 1.000000e+00 : f32
    %262 = vector.broadcast %cst_109 : f32 to vector<24x32xf32>
    %263 = arith.addf %262, %261 : vector<24x32xf32>
    %264 = arith.divf %262, %263 : vector<24x32xf32>
    %265 = vector.extract_strided_slice %246 {offsets = [0, 64], sizes = [24, 32], strides = [1, 1]} : vector<24x96xf32> to vector<24x32xf32>
    %266 = vector.extract_strided_slice %237 {offsets = [0, 64], sizes = [1, 32], strides = [1, 1]} : vector<1x96xf32> to vector<1x32xf32>
    %267 = vector.broadcast %266 : vector<1x32xf32> to vector<24x32xf32>
    %268 = arith.mulf %255, %267 : vector<24x32xf32>
    %269 = arith.addf %265, %268 : vector<24x32xf32>
    %270 = math.tanh %269 : vector<24x32xf32>
    %cst_110 = arith.constant 1.000000e+00 : f32
    %271 = vector.broadcast %cst_110 : f32 to vector<24x32xf32>
    %272 = arith.subf %271, %264 : vector<24x32xf32>
    %273 = arith.mulf %272, %270 : vector<24x32xf32>
    %274 = arith.truncf %273 : vector<24x32xf32> to vector<24x32xbf16>
    %c6_111 = arith.constant 6 : index
    %c0_112 = arith.constant 0 : index
    %c0_113 = arith.constant 0 : index
    %275 = vector.load %arg8[%c6_111, %c0_112, %c0_113] : memref<8x1x96xf32, #tpu.memory_space<vmem>>, vector<1x1x96xf32>
    %276 = vector.shape_cast %275 : vector<1x1x96xf32> to vector<1x96xf32>
    %c7_114 = arith.constant 7 : index
    %c0_115 = arith.constant 0 : index
    %c0_116 = arith.constant 0 : index
    %277 = vector.load %arg8[%c7_114, %c0_115, %c0_116] : memref<8x1x96xf32, #tpu.memory_space<vmem>>, vector<1x1x96xf32>
    %278 = vector.shape_cast %277 : vector<1x1x96xf32> to vector<1x96xf32>
    %c7_117 = arith.constant 7 : index
    %c0_118 = arith.constant 0 : index
    %c0_119 = arith.constant 0 : index
    %279 = vector.load %arg7[%c7_117, %c0_118, %c0_119] : memref<10x32x96xbf16, #tpu.memory_space<vmem>>, vector<1x32x96xbf16>
    %280 = vector.shape_cast %279 : vector<1x32x96xbf16> to vector<32x96xbf16>
    %cst_120 = arith.constant dense<0.000000e+00> : vector<24x96xf32>
    %281 = tpu.matmul %74, %280, %cst_120 {dimension_numbers = #tpu.dot_dimension_numbers<[1], [0], [0], [1], [0, 0, 1, 1], [], []>} : vector<24x32xbf16>, vector<32x96xbf16>, vector<24x96xf32> -> vector<24x96xf32>
    %282 = vector.broadcast %276 : vector<1x96xf32> to vector<24x96xf32>
    %283 = arith.addf %282, %281 : vector<24x96xf32>
    %c8_121 = arith.constant 8 : index
    %c0_122 = arith.constant 0 : index
    %c0_123 = arith.constant 0 : index
    %284 = vector.load %arg7[%c8_121, %c0_122, %c0_123] : memref<10x32x96xbf16, #tpu.memory_space<vmem>>, vector<1x32x96xbf16>
    %285 = vector.shape_cast %284 : vector<1x32x96xbf16> to vector<32x96xbf16>
    %cst_124 = arith.constant dense<0.000000e+00> : vector<24x96xf32>
    %286 = tpu.matmul %193, %285, %cst_124 {dimension_numbers = #tpu.dot_dimension_numbers<[1], [0], [0], [1], [0, 0, 1, 1], [], []>} : vector<24x32xbf16>, vector<32x96xbf16>, vector<24x96xf32> -> vector<24x96xf32>
    %287 = arith.addf %283, %286 : vector<24x96xf32>
    %c9 = arith.constant 9 : index
    %c0_125 = arith.constant 0 : index
    %c0_126 = arith.constant 0 : index
    %288 = vector.load %arg7[%c9, %c0_125, %c0_126] : memref<10x32x96xbf16, #tpu.memory_space<vmem>>, vector<1x32x96xbf16>
    %289 = vector.shape_cast %288 : vector<1x32x96xbf16> to vector<32x96xbf16>
    %cst_127 = arith.constant dense<0.000000e+00> : vector<24x96xf32>
    %290 = tpu.matmul %274, %289, %cst_127 {dimension_numbers = #tpu.dot_dimension_numbers<[1], [0], [0], [1], [0, 0, 1, 1], [], []>} : vector<24x32xbf16>, vector<32x96xbf16>, vector<24x96xf32> -> vector<24x96xf32>
    %291 = vector.broadcast %278 : vector<1x96xf32> to vector<24x96xf32>
    %292 = arith.addf %290, %291 : vector<24x96xf32>
    %293 = vector.extract_strided_slice %287 {offsets = [0, 0], sizes = [24, 32], strides = [1, 1]} : vector<24x96xf32> to vector<24x32xf32>
    %294 = vector.extract_strided_slice %292 {offsets = [0, 0], sizes = [24, 32], strides = [1, 1]} : vector<24x96xf32> to vector<24x32xf32>
    %295 = arith.addf %293, %294 : vector<24x32xf32>
    %296 = arith.negf %295 : vector<24x32xf32>
    %297 = math.exp %296 : vector<24x32xf32>
    %cst_128 = arith.constant 1.000000e+00 : f32
    %298 = vector.broadcast %cst_128 : f32 to vector<24x32xf32>
    %299 = arith.addf %298, %297 : vector<24x32xf32>
    %300 = arith.divf %298, %299 : vector<24x32xf32>
    %301 = vector.extract_strided_slice %287 {offsets = [0, 32], sizes = [24, 32], strides = [1, 1]} : vector<24x96xf32> to vector<24x32xf32>
    %302 = vector.extract_strided_slice %292 {offsets = [0, 32], sizes = [24, 32], strides = [1, 1]} : vector<24x96xf32> to vector<24x32xf32>
    %303 = arith.addf %301, %302 : vector<24x32xf32>
    %304 = arith.negf %303 : vector<24x32xf32>
    %305 = math.exp %304 : vector<24x32xf32>
    %cst_129 = arith.constant 1.000000e+00 : f32
    %306 = vector.broadcast %cst_129 : f32 to vector<24x32xf32>
    %307 = arith.addf %306, %305 : vector<24x32xf32>
    %308 = arith.divf %306, %307 : vector<24x32xf32>
    %309 = vector.extract_strided_slice %287 {offsets = [0, 64], sizes = [24, 32], strides = [1, 1]} : vector<24x96xf32> to vector<24x32xf32>
    %310 = vector.extract_strided_slice %292 {offsets = [0, 64], sizes = [24, 32], strides = [1, 1]} : vector<24x96xf32> to vector<24x32xf32>
    %311 = arith.mulf %300, %310 : vector<24x32xf32>
    %312 = arith.addf %309, %311 : vector<24x32xf32>
    %313 = math.tanh %312 : vector<24x32xf32>
    %cst_130 = arith.constant 1.000000e+00 : f32
    %314 = vector.broadcast %cst_130 : f32 to vector<24x32xf32>
    %315 = arith.subf %314, %308 : vector<24x32xf32>
    %316 = arith.mulf %315, %313 : vector<24x32xf32>
    %317 = arith.mulf %308, %273 : vector<24x32xf32>
    %318 = arith.addf %316, %317 : vector<24x32xf32>
    %c1_131 = arith.constant 1 : index
    %c0_132 = arith.constant 0 : index
    %c0_133 = arith.constant 0 : index
    %319 = vector.load %arg9[%c1_131, %c0_132, %c0_133] : memref<6x1x32xf32, #tpu.memory_space<vmem>>, vector<1x1x32xf32>
    %320 = vector.shape_cast %319 : vector<1x1x32xf32> to vector<1x32xf32>
    %321 = vector.broadcast %320 : vector<1x32xf32> to vector<24x32xf32>
    %322 = arith.mulf %233, %321 : vector<24x32xf32>
    %c2_134 = arith.constant 2 : index
    %c0_135 = arith.constant 0 : index
    %c0_136 = arith.constant 0 : index
    %323 = vector.load %arg9[%c2_134, %c0_135, %c0_136] : memref<6x1x32xf32, #tpu.memory_space<vmem>>, vector<1x1x32xf32>
    %324 = vector.shape_cast %323 : vector<1x1x32xf32> to vector<1x32xf32>
    %325 = vector.broadcast %324 : vector<1x32xf32> to vector<24x32xf32>
    %326 = arith.mulf %318, %325 : vector<24x32xf32>
    %327 = arith.addf %322, %326 : vector<24x32xf32>
    %c4_137 = arith.constant 4 : index
    %c0_138 = arith.constant 0 : index
    %c0_139 = arith.constant 0 : index
    %328 = vector.load %arg9[%c4_137, %c0_138, %c0_139] : memref<6x1x32xf32, #tpu.memory_space<vmem>>, vector<1x1x32xf32>
    %329 = vector.shape_cast %328 : vector<1x1x32xf32> to vector<1x32xf32>
    %330 = vector.broadcast %329 : vector<1x32xf32> to vector<24x32xf32>
    %331 = arith.addf %327, %330 : vector<24x32xf32>
    %cst_140 = arith.constant dense<0.000000e+00> : vector<24xf32>
    %332 = vector.multi_reduction <add>, %331, %cst_140 [1] : vector<24x32xf32> to vector<24xf32>
    %333 = vector.shape_cast %332 : vector<24xf32> to vector<24x1xf32>
    %cst_141 = arith.constant 5.000000e-01 : f32
    %334 = vector.broadcast %cst_141 : f32 to vector<24x1xf32>
    %335 = arith.mulf %334, %333 : vector<24x1xf32>
    %336 = arith.mulf %333, %333 : vector<24x1xf32>
    %337 = arith.mulf %336, %333 : vector<24x1xf32>
    %cst_142 = arith.constant 4.471500e-02 : f32
    %338 = vector.broadcast %cst_142 : f32 to vector<24x1xf32>
    %339 = arith.mulf %338, %337 : vector<24x1xf32>
    %340 = arith.addf %333, %339 : vector<24x1xf32>
    %cst_143 = arith.constant 0.797884583 : f32
    %341 = vector.broadcast %cst_143 : f32 to vector<24x1xf32>
    %342 = arith.mulf %341, %340 : vector<24x1xf32>
    %343 = math.tanh %342 : vector<24x1xf32>
    %cst_144 = arith.constant 1.000000e+00 : f32
    %344 = vector.broadcast %cst_144 : f32 to vector<24x1xf32>
    %345 = arith.addf %344, %343 : vector<24x1xf32>
    %346 = arith.mulf %335, %345 : vector<24x1xf32>
    %c0_145 = arith.constant 0 : index
    %c0_146 = arith.constant 0 : index
    %c0_147 = arith.constant 0 : index
    %347 = vector.load %arg6[%c0_145, %c0_146, %c0_147] : memref<2x8x24xf32, #tpu.memory_space<vmem>>, vector<1x8x24xf32>
    %348 = vector.shape_cast %347 : vector<1x8x24xf32> to vector<8x24xf32>
    %cst_148 = arith.constant 0.000000e+00 : f32
    %349 = vector.broadcast %cst_148 : f32 to vector<24x8xf32>
    %350 = arith.cmpf ogt, %31, %349 : vector<24x8xf32>
    %cst_149 = arith.constant -1.000000e+30 : f32
    %351 = vector.shape_cast %346 : vector<24x1xf32> to vector<24x1xf32>
    %352 = vector.broadcast %351 : vector<24x1xf32> to vector<24x8xf32>
    %353 = vector.broadcast %cst_149 : f32 to vector<24x8xf32>
    %354 = arith.select %350, %352, %353 : vector<24x8xi1>, vector<24x8xf32>
    %cst_150 = arith.constant dense<0xFF800000> : vector<8xf32>
    %355 = vector.multi_reduction <maximumf>, %354, %cst_150 [0] : vector<24x8xf32> to vector<8xf32>
    %356 = vector.shape_cast %355 : vector<8xf32> to vector<1x8xf32>
    %357 = vector.broadcast %356 : vector<1x8xf32> to vector<24x8xf32>
    %358 = arith.mulf %31, %357 : vector<24x8xf32>
    %cst_151 = arith.constant dense<0.000000e+00> : vector<24xf32>
    %359 = vector.multi_reduction <add>, %358, %cst_151 [1] : vector<24x8xf32> to vector<24xf32>
    %360 = vector.shape_cast %359 : vector<24xf32> to vector<24x1xf32>
    %361 = arith.subf %346, %360 : vector<24x1xf32>
    %362 = math.exp %361 : vector<24x1xf32>
    %cst_152 = arith.constant dense<0.000000e+00> : vector<8x1xf32>
    %363 = tpu.matmul %348, %362, %cst_152 {dimension_numbers = #tpu.dot_dimension_numbers<[1], [0], [0], [1], [0, 0, 1, 1], [], []>} : vector<8x24xf32>, vector<24x1xf32>, vector<8x1xf32> -> vector<8x1xf32>
    %cst_153 = arith.constant dense<0.000000e+00> : vector<24x1xf32>
    %364 = tpu.matmul %31, %363, %cst_153 {dimension_numbers = #tpu.dot_dimension_numbers<[1], [0], [0], [1], [0, 0, 1, 1], [], []>} : vector<24x8xf32>, vector<8x1xf32>, vector<24x1xf32> -> vector<24x1xf32>
    %365 = tpu.reciprocal %364 {approx = true} : vector<24x1xf32> -> vector<24x1xf32>
    %366 = arith.mulf %362, %365 : vector<24x1xf32>
    %c0_154 = arith.constant 0 : index
    %c0_155 = arith.constant 0 : index
    %c0_156 = arith.constant 0 : index
    %367 = vector.load %arg2[%c0_154, %c0_155, %c0_156] : memref<1x24x1xf32, #tpu.memory_space<vmem>>, vector<1x24x1xf32>
    %368 = vector.shape_cast %367 : vector<1x24x1xf32> to vector<24x1xf32>
    %369 = arith.addf %346, %368 : vector<24x1xf32>
    %cst_157 = arith.constant 1.000000e+01 : f32
    %370 = vector.broadcast %cst_157 : f32 to vector<24x1xf32>
    %371 = arith.mulf %369, %370 : vector<24x1xf32>
    %cst_158 = arith.constant 0.000000e+00 : f32
    %372 = vector.broadcast %cst_158 : f32 to vector<24x8xf32>
    %373 = arith.cmpf ogt, %31, %372 : vector<24x8xf32>
    %cst_159 = arith.constant -1.000000e+30 : f32
    %374 = vector.shape_cast %371 : vector<24x1xf32> to vector<24x1xf32>
    %375 = vector.broadcast %374 : vector<24x1xf32> to vector<24x8xf32>
    %376 = vector.broadcast %cst_159 : f32 to vector<24x8xf32>
    %377 = arith.select %373, %375, %376 : vector<24x8xi1>, vector<24x8xf32>
    %cst_160 = arith.constant dense<0xFF800000> : vector<8xf32>
    %378 = vector.multi_reduction <maximumf>, %377, %cst_160 [0] : vector<24x8xf32> to vector<8xf32>
    %379 = vector.shape_cast %378 : vector<8xf32> to vector<1x8xf32>
    %380 = vector.broadcast %379 : vector<1x8xf32> to vector<24x8xf32>
    %381 = arith.mulf %31, %380 : vector<24x8xf32>
    %cst_161 = arith.constant dense<0.000000e+00> : vector<24xf32>
    %382 = vector.multi_reduction <add>, %381, %cst_161 [1] : vector<24x8xf32> to vector<24xf32>
    %383 = vector.shape_cast %382 : vector<24xf32> to vector<24x1xf32>
    %384 = arith.subf %371, %383 : vector<24x1xf32>
    %385 = math.exp %384 : vector<24x1xf32>
    %cst_162 = arith.constant dense<0.000000e+00> : vector<8x1xf32>
    %386 = tpu.matmul %348, %385, %cst_162 {dimension_numbers = #tpu.dot_dimension_numbers<[1], [0], [0], [1], [0, 0, 1, 1], [], []>} : vector<8x24xf32>, vector<24x1xf32>, vector<8x1xf32> -> vector<8x1xf32>
    %cst_163 = arith.constant dense<0.000000e+00> : vector<24x1xf32>
    %387 = tpu.matmul %31, %386, %cst_163 {dimension_numbers = #tpu.dot_dimension_numbers<[1], [0], [0], [1], [0, 0, 1, 1], [], []>} : vector<24x8xf32>, vector<8x1xf32>, vector<24x1xf32> -> vector<24x1xf32>
    %388 = tpu.reciprocal %387 {approx = true} : vector<24x1xf32> -> vector<24x1xf32>
    %389 = arith.mulf %385, %388 : vector<24x1xf32>
    %390 = arith.mulf %366, %389 : vector<24x1xf32>
    %c1_164 = arith.constant 1 : index
    %c0_165 = arith.constant 0 : index
    %c0_166 = arith.constant 0 : index
    %391 = vector.load %arg6[%c1_164, %c0_165, %c0_166] : memref<2x8x24xf32, #tpu.memory_space<vmem>>, vector<1x8x24xf32>
    %392 = vector.shape_cast %391 : vector<1x8x24xf32> to vector<8x24xf32>
    %393 = vector.broadcast %390 : vector<24x1xf32> to vector<24x32xf32>
    %394 = arith.mulf %393, %32 : vector<24x32xf32>
    %cst_167 = arith.constant dense<0.000000e+00> : vector<8x32xf32>
    %395 = tpu.matmul %392, %394, %cst_167 {dimension_numbers = #tpu.dot_dimension_numbers<[1], [0], [0], [1], [0, 0, 1, 1], [], []>} : vector<8x24xf32>, vector<24x32xf32>, vector<8x32xf32> -> vector<8x32xf32>
    %396 = arith.truncf %395 : vector<8x32xf32> to vector<8x32xbf16>
    %c0_168 = arith.constant 0 : index
    %c0_169 = arith.constant 0 : index
    %397 = vector.load %arg11[%c0_168, %c0_169] : memref<32x32xbf16, #tpu.memory_space<vmem>>, vector<32x32xbf16>
    %cst_170 = arith.constant dense<0.000000e+00> : vector<8x32xf32>
    %398 = tpu.matmul %396, %397, %cst_170 {dimension_numbers = #tpu.dot_dimension_numbers<[1], [0], [0], [1], [0, 0, 1, 1], [], []>} : vector<8x32xbf16>, vector<32x32xbf16>, vector<8x32xf32> -> vector<8x32xf32>
    %c0_171 = arith.constant 0 : index
    %c0_172 = arith.constant 0 : index
    %399 = vector.load %arg10[%c0_171, %c0_172] : memref<8x8xbf16, #tpu.memory_space<vmem>>, vector<8x8xbf16>
    %400 = arith.truncf %398 : vector<8x32xf32> to vector<8x32xbf16>
    %cst_173 = arith.constant dense<0.000000e+00> : vector<8x32xf32>
    %401 = tpu.matmul %399, %400, %cst_173 {dimension_numbers = #tpu.dot_dimension_numbers<[1], [0], [0], [1], [0, 0, 1, 1], [], []>} : vector<8x8xbf16>, vector<8x32xbf16>, vector<8x32xf32> -> vector<8x32xf32>
    %c3_174 = arith.constant 3 : index
    %c0_175 = arith.constant 0 : index
    %c0_176 = arith.constant 0 : index
    %402 = vector.load %arg9[%c3_174, %c0_175, %c0_176] : memref<6x1x32xf32, #tpu.memory_space<vmem>>, vector<1x1x32xf32>
    %403 = vector.shape_cast %402 : vector<1x1x32xf32> to vector<1x32xf32>
    %404 = vector.broadcast %403 : vector<1x32xf32> to vector<8x32xf32>
    %405 = arith.addf %401, %404 : vector<8x32xf32>
    %cst_177 = arith.constant 5.000000e-01 : f32
    %406 = vector.broadcast %cst_177 : f32 to vector<8x32xf32>
    %407 = arith.mulf %406, %405 : vector<8x32xf32>
    %408 = arith.mulf %405, %405 : vector<8x32xf32>
    %409 = arith.mulf %408, %405 : vector<8x32xf32>
    %cst_178 = arith.constant 4.471500e-02 : f32
    %410 = vector.broadcast %cst_178 : f32 to vector<8x32xf32>
    %411 = arith.mulf %410, %409 : vector<8x32xf32>
    %412 = arith.addf %405, %411 : vector<8x32xf32>
    %cst_179 = arith.constant 0.797884583 : f32
    %413 = vector.broadcast %cst_179 : f32 to vector<8x32xf32>
    %414 = arith.mulf %413, %412 : vector<8x32xf32>
    %415 = math.tanh %414 : vector<8x32xf32>
    %cst_180 = arith.constant 1.000000e+00 : f32
    %416 = vector.broadcast %cst_180 : f32 to vector<8x32xf32>
    %417 = arith.addf %416, %415 : vector<8x32xf32>
    %418 = arith.mulf %407, %417 : vector<8x32xf32>
    %c0_181 = arith.constant 0 : index
    %c0_182 = arith.constant 0 : index
    %419 = vector.load %arg12[%c0_181, %c0_182] : memref<8x32xf32, #tpu.memory_space<vmem>>, vector<8x32xf32>
    %420 = arith.mulf %418, %419 : vector<8x32xf32>
    %c5_183 = arith.constant 5 : index
    %c0_184 = arith.constant 0 : index
    %c0_185 = arith.constant 0 : index
    %421 = vector.load %arg9[%c5_183, %c0_184, %c0_185] : memref<6x1x32xf32, #tpu.memory_space<vmem>>, vector<1x1x32xf32>
    %422 = vector.shape_cast %421 : vector<1x1x32xf32> to vector<1x32xf32>
    %423 = vector.broadcast %422 : vector<1x32xf32> to vector<8x32xf32>
    %424 = arith.addf %420, %423 : vector<8x32xf32>
    %cst_186 = arith.constant dense<0.000000e+00> : vector<8xf32>
    %425 = vector.multi_reduction <add>, %424, %cst_186 [1] : vector<8x32xf32> to vector<8xf32>
    %426 = vector.shape_cast %425 : vector<8xf32> to vector<8x1xf32>
    %c0_187 = arith.constant 0 : index
    %c0_188 = arith.constant 0 : index
    %427 = vector.load %arg13[%c0_187, %c0_188] : memref<2x8xf32, #tpu.memory_space<vmem>>, vector<2x8xf32>
    %cst_189 = arith.constant dense<0.000000e+00> : vector<2x1xf32>
    %428 = tpu.matmul %427, %426, %cst_189 {dimension_numbers = #tpu.dot_dimension_numbers<[1], [0], [0], [1], [0, 0, 1, 1], [], []>} : vector<2x8xf32>, vector<8x1xf32>, vector<2x1xf32> -> vector<2x1xf32>
    %429 = vector.shape_cast %428 : vector<2x1xf32> to vector<1x2x1xf32>
    %c0_190 = arith.constant 0 : index
    %c0_191 = arith.constant 0 : index
    %c0_192 = arith.constant 0 : index
    %430 = vector.load %arg14[%c0_190, %c0_191, %c0_192] : memref<1x2x1xf32, #tpu.memory_space<vmem>>, vector<1x2x1xf32>
    tpu.vector_store %arg14[%c0_190, %c0_191, %c0_192], %429 {strides = array<i32>} : memref<1x2x1xf32, #tpu.memory_space<vmem>>, vector<1x2x1xf32>,
    return
  }
  func.func @transform_0(%arg0: i32) -> (i32, i32, i32) {
    %c0_i32 = arith.constant 0 : i32
    %c0_i32_0 = arith.constant 0 : i32
    %c0_i32_1 = arith.constant 0 : i32
    return %arg0, %c0_i32, %c0_i32_0 : i32, i32, i32
  }
  func.func @transform_1(%arg0: i32) -> (i32, i32, i32) {
    %c0_i32 = arith.constant 0 : i32
    %c0_i32_0 = arith.constant 0 : i32
    %c0_i32_1 = arith.constant 0 : i32
    return %arg0, %c0_i32, %c0_i32_0 : i32, i32, i32
  }
  func.func @transform_2(%arg0: i32) -> (i32, i32) {
    %c0_i32 = arith.constant 0 : i32
    %c0_i32_0 = arith.constant 0 : i32
    %c0_i32_1 = arith.constant 0 : i32
    return %c0_i32, %c0_i32_0 : i32, i32
  }
  func.func @transform_3(%arg0: i32) -> (i32, i32, i32) {
    %c0_i32 = arith.constant 0 : i32
    %c0_i32_0 = arith.constant 0 : i32
    %c0_i32_1 = arith.constant 0 : i32
    %c0_i32_2 = arith.constant 0 : i32
    return %c0_i32, %c0_i32_0, %c0_i32_1 : i32, i32, i32
  }
  func.func @transform_4(%arg0: i32) -> (i32, i32, i32) {
    %c0_i32 = arith.constant 0 : i32
    %c0_i32_0 = arith.constant 0 : i32
    %c0_i32_1 = arith.constant 0 : i32
    %c0_i32_2 = arith.constant 0 : i32
    return %c0_i32, %c0_i32_0, %c0_i32_1 : i32, i32, i32
  }
  func.func @transform_5(%arg0: i32) -> (i32, i32, i32) {
    %c0_i32 = arith.constant 0 : i32
    %c0_i32_0 = arith.constant 0 : i32
    %c0_i32_1 = arith.constant 0 : i32
    %c0_i32_2 = arith.constant 0 : i32
    return %c0_i32, %c0_i32_0, %c0_i32_1 : i32, i32, i32
  }
  func.func @transform_6(%arg0: i32) -> (i32, i32, i32) {
    %c0_i32 = arith.constant 0 : i32
    %c0_i32_0 = arith.constant 0 : i32
    %c0_i32_1 = arith.constant 0 : i32
    %c0_i32_2 = arith.constant 0 : i32
    return %c0_i32, %c0_i32_0, %c0_i32_1 : i32, i32, i32
  }
  func.func @transform_7(%arg0: i32) -> (i32, i32, i32) {
    %c0_i32 = arith.constant 0 : i32
    %c0_i32_0 = arith.constant 0 : i32
    %c0_i32_1 = arith.constant 0 : i32
    %c0_i32_2 = arith.constant 0 : i32
    return %c0_i32, %c0_i32_0, %c0_i32_1 : i32, i32, i32
  }
  func.func @transform_8(%arg0: i32) -> (i32, i32, i32) {
    %c0_i32 = arith.constant 0 : i32
    %c0_i32_0 = arith.constant 0 : i32
    %c0_i32_1 = arith.constant 0 : i32
    %c0_i32_2 = arith.constant 0 : i32
    return %c0_i32, %c0_i32_0, %c0_i32_1 : i32, i32, i32
  }
  func.func @transform_9(%arg0: i32) -> (i32, i32) {
    %c0_i32 = arith.constant 0 : i32
    %c0_i32_0 = arith.constant 0 : i32
    %c0_i32_1 = arith.constant 0 : i32
    return %c0_i32, %c0_i32_0 : i32, i32
  }
  func.func @transform_10(%arg0: i32) -> (i32, i32) {
    %c0_i32 = arith.constant 0 : i32
    %c0_i32_0 = arith.constant 0 : i32
    %c0_i32_1 = arith.constant 0 : i32
    return %c0_i32, %c0_i32_0 : i32, i32
  }
  func.func @transform_11(%arg0: i32) -> (i32, i32) {
    %c0_i32 = arith.constant 0 : i32
    %c0_i32_0 = arith.constant 0 : i32
    %c0_i32_1 = arith.constant 0 : i32
    return %c0_i32, %c0_i32_0 : i32, i32
  }
  func.func @transform_12(%arg0: i32) -> (i32, i32) {
    %c0_i32 = arith.constant 0 : i32
    %c0_i32_0 = arith.constant 0 : i32
    %c0_i32_1 = arith.constant 0 : i32
    return %c0_i32, %c0_i32_0 : i32, i32
  }
  func.func @transform_13(%arg0: i32) -> (i32, i32, i32) {
    %c0_i32 = arith.constant 0 : i32
    %c0_i32_0 = arith.constant 0 : i32
    %c0_i32_1 = arith.constant 0 : i32
    return %arg0, %c0_i32, %c0_i32_0 : i32, i32, i32
  }
}

</mosaic_0001>

<llo_original>
// kernel: tile.18
$region0: #{tile.18}
  #allocation0 [shape = 's32[1]{0}', space=sflag, size = 0x4, scoped, tag = 'scoped memory for tile.18']
  %s0 = inlined_call_operand.vmem [shape: f32[4], index: 0, kind: input, shape index: {}]
  %s1 = inlined_call_operand.vmem [shape: f32[2,4], index: 1, kind: output, shape index: {}]
  // Predicated region
  $region2: #{tile.18} parent=0 // pred_check
    _
  $region3: #{tile.18} parent=0 // pred_check_branch
    %3 = sbr.rel (0) target = $region5
  $region4: #{tile.18} parent=0 // pred_region
    _
  $region5: #{tile.18} parent=0 // pred_fallthru
    _
  %v4 = vld [vmem:[%s0] ss:$0 sm:$0xff]
  %5 = vst [vmem:[%s1] sm:$0x3] %v4

// kernel: tile.0
$region0: #{tile.0}
  %s0 = inlined_call_operand.vmem [shape: f32[2,4], index: 0, kind: input, shape index: {}]
  %s1 = inlined_call_operand.vmem [shape: f32[1,8,1], index: 1, kind: output, shape index: {}]
  $region1: #{tile.0} parent=0
    #allocation0 [shape = 'u8[4096]{0}', space=vmem, size = 0x1000, scoped, tag = 'scoped mem for input reshape']
    %s3 = ssub.s32 4, 1
    %v4 = vld [vmem:[%s0] sm:%s3]
    %5 = vst [vmem:[#allocation0] sm:%s3] %v4
    %v6 = vld [vmem:[#allocation0] sm:$0x3]
    %vm7 = vcmask 7168
    %8 = vst.msk [vmem:[%s1] ss:$4 sm:$0x3] %vm7, %v6
    %v9 = vld [vmem:[#allocation0] sm:$0x3]
    %10 = vrot.lane.b32.xlu0 %v9, 127
    %v11 = vpop.permute.xlu0 %10
    %vm12 = vcmask 7168
    %s13 = scalar_lea.vmem %s1, 1
    %14 = vst.msk [vmem:[%s13] ss:$4 sm:$0x3] %vm12, %v11
    %v15 = vld [vmem:[#allocation0] sm:$0x3]
    %16 = vrot.lane.b32.xlu0 %v15, 126
    %v17 = vpop.permute.xlu0 %16
    %vm18 = vcmask 7168
    %s19 = scalar_lea.vmem %s1, 2
    %20 = vst.msk [vmem:[%s19] ss:$4 sm:$0x3] %vm18, %v17
    %v21 = vld [vmem:[#allocation0] sm:$0x3]
    %22 = vrot.lane.b32.xlu0 %v21, 125
    %v23 = vpop.permute.xlu0 %22
    %vm24 = vcmask 7168
    %s25 = scalar_lea.vmem %s1, 3
    %26 = vst.msk [vmem:[%s25] ss:$4 sm:$0x3] %vm24, %v23

// kernel: ga_ac_forward.1
$region0: #{ga_ac_forward.1}
  #allocation0 [shape = 'u32[]', space=smem, size = 0x4, offset = 0x4, fixed_abs, tag = 'smem constant byte address 0x4 - core index']
  #allocation1 [shape = 'u32[72,128]{1,0:T(1,128)}', space=vmem, size = 0x9000, scoped, tag = 'internal scratch']
  %s0 = inlined_call_operand.vmem [shape: f32[1,8,15], index: 0, kind: input, shape index: {}]
  %s1 = inlined_call_operand.vmem [shape: f32[1,24,1], index: 1, kind: input, shape index: {}]
  %s2 = inlined_call_operand.vmem [shape: bf16[15,32], index: 2, kind: input, shape index: {}]
  %s3 = inlined_call_operand.vmem [shape: f32[2,8,1], index: 3, kind: input, shape index: {}]
  %s4 = inlined_call_operand.vmem [shape: f32[2,24,8], index: 4, kind: input, shape index: {}]
  %s5 = inlined_call_operand.vmem [shape: f32[2,8,24], index: 5, kind: input, shape index: {}]
  %s6 = inlined_call_operand.vmem [shape: bf16[10,32,96], index: 6, kind: input, shape index: {}]
  %s7 = inlined_call_operand.vmem [shape: f32[8,1,96], index: 7, kind: input, shape index: {}]
  %s8 = inlined_call_operand.vmem [shape: f32[6,1,32], index: 8, kind: input, shape index: {}]
  %s9 = inlined_call_operand.vmem [shape: bf16[8,8], index: 9, kind: input, shape index: {}]
  %s10 = inlined_call_operand.vmem [shape: bf16[32,32], index: 10, kind: input, shape index: {}]
  %s11 = inlined_call_operand.vmem [shape: f32[8,32], index: 11, kind: input, shape index: {}]
  %s12 = inlined_call_operand.vmem [shape: f32[2,8], index: 12, kind: input, shape index: {}]
  %s13 = inlined_call_operand.vmem [shape: f32[1,2,1], index: 13, kind: output, shape index: {}]
  %s14 = sld [smem:[#allocation0]]
  $region62: #{ga_ac_forward.1} parent=0
    _
  %s16 = ssub.s32 1, %s14
  %s17 = scalar_select 0, %s16, %s14
  // Predicated region
  $region2: #{ga_ac_forward.1} parent=0 // pred_check
    _
  $region3: #{ga_ac_forward.1} parent=0 // pred_check_branch
    %19 = sbr.rel (0) target = $region5
  $region4: #{ga_ac_forward.1} parent=0 // pred_region
    _
  $region5: #{ga_ac_forward.1} parent=0 // pred_fallthru
    _
  // Predicated region
  $region6: #{ga_ac_forward.1} parent=0 // pred_check
    _
  $region7: #{ga_ac_forward.1} parent=0 // pred_check_branch
    %21 = sbr.rel (0) target = $region9
  $region8: #{ga_ac_forward.1} parent=0 // pred_region
    _
  $region9: #{ga_ac_forward.1} parent=0 // pred_fallthru
    _
  // Predicated region
  $region10: #{ga_ac_forward.1} parent=0 // pred_check
    _
  $region11: #{ga_ac_forward.1} parent=0 // pred_check_branch
    %23 = sbr.rel (0) target = $region13
  $region12: #{ga_ac_forward.1} parent=0 // pred_region
    _
  $region13: #{ga_ac_forward.1} parent=0 // pred_fallthru
    _
  // Predicated region
  $region14: #{ga_ac_forward.1} parent=0 // pred_check
    _
  $region15: #{ga_ac_forward.1} parent=0 // pred_check_branch
    %25 = sbr.rel (0) target = $region17
  $region16: #{ga_ac_forward.1} parent=0 // pred_region
    _
  $region17: #{ga_ac_forward.1} parent=0 // pred_fallthru
    _
  // Predicated region
  $region18: #{ga_ac_forward.1} parent=0 // pred_check
    _
  $region19: #{ga_ac_forward.1} parent=0 // pred_check_branch
    %27 = sbr.rel (0) target = $region21
  $region20: #{ga_ac_forward.1} parent=0 // pred_region
    _
  $region21: #{ga_ac_forward.1} parent=0 // pred_fallthru
    _
  // Predicated region
  $region22: #{ga_ac_forward.1} parent=0 // pred_check
    _
  $region23: #{ga_ac_forward.1} parent=0 // pred_check_branch
    %29 = sbr.rel (0) target = $region25
  $region24: #{ga_ac_forward.1} parent=0 // pred_region
    _
  $region25: #{ga_ac_forward.1} parent=0 // pred_fallthru
    _
  // Predicated region
  $region26: #{ga_ac_forward.1} parent=0 // pred_check
    _
  $region27: #{ga_ac_forward.1} parent=0 // pred_check_branch
    %31 = sbr.rel (0) target = $region29
  $region28: #{ga_ac_forward.1} parent=0 // pred_region
    _
  $region29: #{ga_ac_forward.1} parent=0 // pred_fallthru
    _
  // Predicated region
  $region30: #{ga_ac_forward.1} parent=0 // pred_check
    _
  $region31: #{ga_ac_forward.1} parent=0 // pred_check_branch
    %33 = sbr.rel (0) target = $region33
  $region32: #{ga_ac_forward.1} parent=0 // pred_region
    _
  $region33: #{ga_ac_forward.1} parent=0 // pred_fallthru
    _
  // Predicated region
  $region34: #{ga_ac_forward.1} parent=0 // pred_check
    _
  $region35: #{ga_ac_forward.1} parent=0 // pred_check_branch
    %35 = sbr.rel (0) target = $region37
  $region36: #{ga_ac_forward.1} parent=0 // pred_region
    _
  $region37: #{ga_ac_forward.1} parent=0 // pred_fallthru
    _
  // Predicated region
  $region38: #{ga_ac_forward.1} parent=0 // pred_check
    _
  $region39: #{ga_ac_forward.1} parent=0 // pred_check_branch
    %37 = sbr.rel (0) target = $region41
  $region40: #{ga_ac_forward.1} parent=0 // pred_region
    _
  $region41: #{ga_ac_forward.1} parent=0 // pred_fallthru
    _
  // Predicated region
  $region42: #{ga_ac_forward.1} parent=0 // pred_check
    _
  $region43: #{ga_ac_forward.1} parent=0 // pred_check_branch
    %39 = sbr.rel (0) target = $region45
  $region44: #{ga_ac_forward.1} parent=0 // pred_region
    _
  $region45: #{ga_ac_forward.1} parent=0 // pred_fallthru
    _
  // Predicated region
  $region46: #{ga_ac_forward.1} parent=0 // pred_check
    _
  $region47: #{ga_ac_forward.1} parent=0 // pred_check_branch
    %41 = sbr.rel (0) target = $region49
  $region48: #{ga_ac_forward.1} parent=0 // pred_region
    _
  $region49: #{ga_ac_forward.1} parent=0 // pred_fallthru
    _
  // Predicated region
  $region50: #{ga_ac_forward.1} parent=0 // pred_check
    _
  $region51: #{ga_ac_forward.1} parent=0 // pred_check_branch
    %43 = sbr.rel (0) target = $region53
  $region52: #{ga_ac_forward.1} parent=0 // pred_region
    _
  $region53: #{ga_ac_forward.1} parent=0 // pred_fallthru
    _
  %v45 = vld [vmem:[%s0] sm:$0xff]
  %v46 = vpack.c.bf16 %v45, %v45
  %v47 = vld [vmem:[%s2] sm:$0xf]
  %v48 = vld [vmem:[%s2 + $0x4] sm:$0xf]
  %v49 = vld [vmem:[%s8] sm:$0x1]
  %v51 = vperm.slane %v49, 0
  %v55 = vunpack.c.l.b16 %v47
  %v56 = vunpack.c.l.b16 %v48
  %v57 = vpack.c.b16 %v56, %v55
  %vm58 = vcmask 121856
  %v60 = vsel %vm58, %v46, 0
  %vm62 = vcmask 1046528
  %vm63 = vcmask 1047552
  %v64 = vsel %vm62, 4294967295, 65535
  %v65 = vsel %vm63, %v64, 0
  %v67 = vand.u32 %v57, %v65
  %69 = vmatpush.bf16.msra.mxu0 0
  %70 = vmatpush.bf16.msra.mxu0 0
  %71 = vmatpush.bf16.msra.mxu0 0
  %72 = vmatpush.bf16.msra.mxu0 0
  %73 = vmatpush.bf16.msra.mxu0 0
  %74 = vmatpush.bf16.msra.mxu0 0
  %75 = vmatpush.bf16.msra.mxu0 0
  %76 = vmatpush.bf16.msra.mxu0 %v67
  %77 = vmatmul.bf16.gmra.mxu0 %v60
  %v78 = vpop.f32.mrf.mxu0
  %v79 = vadd.f32 %v51, %v78
  %v80 = vpop.f32.mrf.mxu0
  %81 = vdwg.mxu0
  %v82 = vld [vmem:[%s3] sm:$0xff]
  %84 = vset.pattern.permute.xlu0 0
  %85 = vperm.xlu0 %84, %v82
  %v86 = vpop.permute.xlu0 %85
  %v88 = vmul.f32 %v79, %v86
  %s89 = scalar_lea.vmem %s3, 8
  %v90 = vld [vmem:[%s89] sm:$0xff]
  %92 = vset.pattern.permute.xlu0 0
  %93 = vperm.xlu0 %92, %v90
  %v94 = vpop.permute.xlu0 %93
  %v96 = vadd.f32 %v88, %v94
  %v97 = vmul.f32 %v96, 0.5
  %v98 = vmul.f32 %v96, %v96
  %v99 = vmul.f32 %v98, %v96
  %v100 = vmul.f32 %v99, 0.044715
  %v101 = vadd.f32 %v96, %v100
  %v102 = vmul.f32 %v101, 0.7978846
  %v103 = vtanh.pop %v102
  %v104 = vadd.f32 %v103, 1.0
  %v105 = vmul.f32 %v97, %v104
  %v106 = vld [vmem:[%s4] sm:$0xff]
  %v107 = vld [vmem:[%s4 + $0x8] sm:$0xff]
  %v108 = vld [vmem:[%s4 + $0x10] sm:$0xff]
  %vm109 = vcmask 64512
  %v111 = vsel %vm109, %v106, 0
  %v114 = vsel %vm109, %v107, 0
  %v117 = vsel %vm109, %v108, 0
  %119 = vmatpush.msra.mxu0 0.0
  %120 = vmatpush.msra.mxu0 0.0
  %121 = vmatpush.msra.mxu0 0.0
  %122 = vmatpush.msra.mxu0 0.0
  %123 = vmatpush.msra.mxu0 0.0
  %124 = vmatpush.msra.mxu0 0.0
  %125 = vmatpush.msra.mxu0 0.0
  %126 = vmatpush.msra.mxu0 0.0
  %127 = vmatpush.msra.mxu0 0.0
  %128 = vmatpush.msra.mxu0 0.0
  %129 = vmatpush.msra.mxu0 0.0
  %130 = vmatpush.msra.mxu0 0.0
  %131 = vmatpush.msra.mxu0 0.0
  %132 = vmatpush.msra.mxu0 0.0
  %133 = vmatpush.msra.mxu0 0.0
  %134 = vmatpush.msra.mxu0 %v105
  %135 = vmatmul.f32.gmra.mxu0 %v111
  %v136 = vpop.f32.mrf.mxu0
  %v137 = vadd.f32 0.0, %v136
  %138 = vmatmul.f32.gmra.mxu0 %v114
  %v139 = vpop.f32.mrf.mxu0
  %v140 = vadd.f32 0.0, %v139
  %141 = vmatmul.f32.gmra.mxu0 %v117
  %v142 = vpop.f32.mrf.mxu0
  %v143 = vadd.f32 0.0, %v142
  %144 = vdwg.mxu0
  %s145 = scalar_lea.vmem %s4, 24
  %v146 = vld [vmem:[%s145] sm:$0xff]
  %v147 = vld [vmem:[%s145 + $0x8] sm:$0xff]
  %v148 = vld [vmem:[%s145 + $0x10] sm:$0xff]
  %v150 = vsel %vm109, %v146, 0
  %v153 = vsel %vm109, %v147, 0
  %v156 = vsel %vm109, %v148, 0
  %158 = vmatpush.msra.mxu0 0.0
  %159 = vmatpush.msra.mxu0 0.0
  %160 = vmatpush.msra.mxu0 0.0
  %161 = vmatpush.msra.mxu0 0.0
  %162 = vmatpush.msra.mxu0 0.0
  %163 = vmatpush.msra.mxu0 0.0
  %164 = vmatpush.msra.mxu0 0.0
  %165 = vmatpush.msra.mxu0 0.0
  %166 = vmatpush.msra.mxu0 0.0
  %167 = vmatpush.msra.mxu0 0.0
  %168 = vmatpush.msra.mxu0 0.0
  %169 = vmatpush.msra.mxu0 0.0
  %170 = vmatpush.msra.mxu0 0.0
  %171 = vmatpush.msra.mxu0 0.0
  %172 = vmatpush.msra.mxu0 0.0
  %173 = vmatpush.msra.mxu0 %v105
  %174 = vmatmul.f32.gmra.mxu0 %v150
  %v175 = vpop.f32.mrf.mxu0
  %v176 = vadd.f32 0.0, %v175
  %177 = vmatmul.f32.gmra.mxu0 %v153
  %v178 = vpop.f32.mrf.mxu0
  %v179 = vadd.f32 0.0, %v178
  %180 = vmatmul.f32.gmra.mxu0 %v156
  %v181 = vpop.f32.mrf.mxu0
  %v182 = vadd.f32 0.0, %v181
  %183 = vdwg.mxu0
  %v184 = vpack.c.bf16 %v140, %v137
  %v185 = vpack.c.bf16 %v143, %v143
  %v186 = vpack.c.bf16 %v179, %v176
  %v187 = vpack.c.bf16 %v182, %v182
  %v188 = vld [vmem:[%s7] sm:$0x1]
  %s189 = scalar_lea.vmem %s7, 1
  %v190 = vld [vmem:[%s189] sm:$0x1]
  %v191 = vld [vmem:[%s6] sm:$0xf]
  %v192 = vld [vmem:[%s6 + $0x4] sm:$0xf]
  %v193 = vld [vmem:[%s6 + $0x8] sm:$0xf]
  %v194 = vld [vmem:[%s6 + $0xc] sm:$0xf]
  %v199 = vunpack.c.l.b16 %v191
  %v200 = vunpack.c.l.b16 %v192
  %v201 = vunpack.c.l.b16 %v193
  %v202 = vunpack.c.l.b16 %v194
  %v203 = vpack.c.b16 %v200, %v199
  %v204 = vpack.c.b16 %v202, %v201
  %vm207 = vcmask 261120
  %v209 = vsel %vm207, %v186, 0
  %v212 = vsel %vm207, %v187, 0
  %214 = vmatpush.bf16.msra.mxu0 0
  %215 = vmatpush.bf16.msra.mxu0 0
  %216 = vmatpush.bf16.msra.mxu0 0
  %217 = vmatpush.bf16.msra.mxu0 0
  %218 = vmatpush.bf16.msra.mxu0 0
  %219 = vmatpush.bf16.msra.mxu0 0
  %220 = vmatpush.bf16.msra.mxu0 %v204
  %221 = vmatpush.bf16.msra.mxu0 %v203
  %222 = vmatmul.bf16.gmra.mxu0 %v209
  %v223 = vpop.f32.mrf.mxu0
  %v224 = vadd.f32 0.0, %v223
  %v225 = vpop.f32.mrf.mxu0
  %v226 = vadd.f32 0.0, %v225
  %227 = vmatmul.bf16.gmra.mxu0 %v212
  %v228 = vpop.f32.mrf.mxu0
  %v229 = vadd.f32 0.0, %v228
  %v230 = vpop.f32.mrf.mxu0
  %231 = vdwg.mxu0
  %v233 = vperm.slane %v188, 0
  %v235 = vadd.f32 %v233, %v224
  %v236 = vadd.f32 %v233, %v226
  %v237 = vadd.f32 %v233, %v229
  %v239 = vperm.slane %v190, 0
  %v241 = vadd.f32 %v235, %v239
  %v242 = vadd.f32 %v236, %v239
  %v243 = vadd.f32 %v237, %v239
  %v244 = vxor.u32 %v241, 2147483648
  %v245 = vxor.u32 %v242, 2147483648
  %v246 = vxor.u32 %v243, 2147483648
  %v247 = vmul.f32 %v244, 1.442695
  %v248 = vpow.pop %v247
  %v249 = vmul.f32 %v245, 1.442695
  %v250 = vpow.pop %v249
  %v251 = vmul.f32 %v246, 1.442695
  %v252 = vpow.pop %v251
  %v253 = vadd.f32 %v248, 1.0
  %v254 = vadd.f32 %v250, 1.0
  %v255 = vadd.f32 %v252, 1.0
  %v256 = vrcp.pop %v253
  %v257 = vmul.f32 %v253, %v256
  %v258 = vsub.f32 1.0, %v257
  %v259 = vmul.f32 %v256, %v258
  %v260 = vadd.f32 %v256, %v259
  %vm261 = vweird.f32 %v253
  %vm262 = vweird.f32 %v256
  %vm263 = vmor %vm261, %vm262
  %v264 = vsel %vm263, %v256, %v260
  %v265 = vand.u32 2147483647, %v253
  %vm266 = vcmp.eq.f32.partialorder %v265, 8.507059e+37
  %v267 = vand.u32 %v253, 2147483648
  %v268 = vor.u32 1.1754944e-38, %v267
  %v269 = vsel %vm266, %v268, %v264
  %v270 = vmul.f32 1.0, %v269
  %v271 = vrcp.pop %v254
  %v272 = vmul.f32 %v254, %v271
  %v273 = vsub.f32 1.0, %v272
  %v274 = vmul.f32 %v271, %v273
  %v275 = vadd.f32 %v271, %v274
  %vm276 = vweird.f32 %v254
  %vm277 = vweird.f32 %v271
  %vm278 = vmor %vm276, %vm277
  %v279 = vsel %vm278, %v271, %v275
  %v280 = vand.u32 2147483647, %v254
  %vm281 = vcmp.eq.f32.partialorder %v280, 8.507059e+37
  %v282 = vand.u32 %v254, 2147483648
  %v283 = vor.u32 1.1754944e-38, %v282
  %v284 = vsel %vm281, %v283, %v279
  %v285 = vmul.f32 1.0, %v284
  %v286 = vrcp.pop %v255
  %v287 = vmul.f32 %v255, %v286
  %v288 = vsub.f32 1.0, %v287
  %v289 = vmul.f32 %v286, %v288
  %v290 = vadd.f32 %v286, %v289
  %vm291 = vweird.f32 %v255
  %vm292 = vweird.f32 %v286
  %vm293 = vmor %vm291, %vm292
  %v294 = vsel %vm293, %v286, %v290
  %v295 = vand.u32 2147483647, %v255
  %vm296 = vcmp.eq.f32.partialorder %v295, 8.507059e+37
  %v297 = vand.u32 %v255, 2147483648
  %v298 = vor.u32 1.1754944e-38, %v297
  %v299 = vsel %vm296, %v298, %v294
  %v300 = vmul.f32 1.0, %v299
  %301 = vrot.lane.b32.xlu0 %v239, 64
  %v302 = vpop.permute.xlu0 %301
  %v304 = vmul.f32 %v270, %v302
  %v305 = vmul.f32 %v285, %v302
  %v306 = vmul.f32 %v300, %v302
  %310 = vrot.lane.b32.xlu0 %v304, 64
  %v311 = vpop.permute.xlu0 %310
  %312 = vrot.lane.b32.xlu0 %v305, 64
  %v313 = vpop.permute.xlu0 %312
  %314 = vrot.lane.b32.xlu0 %v306, 64
  %v315 = vpop.permute.xlu0 %314
  %v319 = vadd.f32 %v235, %v311
  %v320 = vadd.f32 %v236, %v313
  %v321 = vadd.f32 %v237, %v315
  %v322 = vtanh.pop %v319
  %v323 = vtanh.pop %v320
  %v324 = vtanh.pop %v321
  %v325 = vsub.f32 1.0, %v270
  %v326 = vsub.f32 1.0, %v285
  %v327 = vsub.f32 1.0, %v300
  %331 = vrot.lane.b32.xlu0 %v322, 96
  %v332 = vpop.permute.xlu0 %331
  %333 = vrot.lane.b32.xlu0 %v323, 96
  %v334 = vpop.permute.xlu0 %333
  %335 = vrot.lane.b32.xlu0 %v324, 96
  %v336 = vpop.permute.xlu0 %335
  %v340 = vmul.f32 %v325, %v332
  %v341 = vmul.f32 %v326, %v334
  %v342 = vmul.f32 %v327, %v336
  %v343 = vpack.c.bf16 %v341, %v340
  %v344 = vpack.c.bf16 %v342, %v342
  %v346 = vsel %vm207, %v184, 0
  %v349 = vsel %vm207, %v185, 0
  %351 = vmatpush.bf16.msra.mxu0 0
  %352 = vmatpush.bf16.msra.mxu0 0
  %353 = vmatpush.bf16.msra.mxu0 0
  %354 = vmatpush.bf16.msra.mxu0 0
  %355 = vmatpush.bf16.msra.mxu0 0
  %356 = vmatpush.bf16.msra.mxu0 0
  %357 = vmatpush.bf16.msra.mxu0 %v204
  %358 = vmatpush.bf16.msra.mxu0 %v203
  %359 = vmatmul.bf16.gmra.mxu0 %v346
  %v360 = vpop.f32.mrf.mxu0
  %v361 = vadd.f32 0.0, %v360
  %v362 = vpop.f32.mrf.mxu0
  %v363 = vadd.f32 0.0, %v362
  %364 = vmatmul.bf16.gmra.mxu0 %v349
  %v365 = vpop.f32.mrf.mxu0
  %v366 = vadd.f32 0.0, %v365
  %v367 = vpop.f32.mrf.mxu0
  %368 = vdwg.mxu0
  %v369 = vadd.f32 %v233, %v361
  %v370 = vadd.f32 %v233, %v363
  %v371 = vadd.f32 %v233, %v366
  %s372 = scalar_lea.vmem %s6, 16
  %v373 = vld [vmem:[%s372] sm:$0xf]
  %v374 = vld [vmem:[%s372 + $0x4] sm:$0xf]
  %v375 = vld [vmem:[%s372 + $0x8] sm:$0xf]
  %v376 = vld [vmem:[%s372 + $0xc] sm:$0xf]
  %379 = vrot.lane.b32.xlu0 %v343, 96
  %v380 = vpop.permute.xlu0 %379
  %381 = vrot.lane.b32.xlu0 %v344, 96
  %v382 = vpop.permute.xlu0 %381
  %v387 = vunpack.c.l.b16 %v373
  %v388 = vunpack.c.l.b16 %v374
  %v389 = vunpack.c.l.b16 %v375
  %v390 = vunpack.c.l.b16 %v376
  %v391 = vpack.c.b16 %v388, %v387
  %v392 = vpack.c.b16 %v390, %v389
  %v396 = vsel %vm207, %v380, 0
  %v399 = vsel %vm207, %v382, 0
  %401 = vmatpush.bf16.msra.mxu0 0
  %402 = vmatpush.bf16.msra.mxu0 0
  %403 = vmatpush.bf16.msra.mxu0 0
  %404 = vmatpush.bf16.msra.mxu0 0
  %405 = vmatpush.bf16.msra.mxu0 0
  %406 = vmatpush.bf16.msra.mxu0 0
  %407 = vmatpush.bf16.msra.mxu0 %v392
  %408 = vmatpush.bf16.msra.mxu0 %v391
  %409 = vmatmul.bf16.gmra.mxu0 %v396
  %v410 = vpop.f32.mrf.mxu0
  %v411 = vadd.f32 %v239, %v410
  %v412 = vpop.f32.mrf.mxu0
  %v413 = vadd.f32 %v239, %v412
  %414 = vmatmul.bf16.gmra.mxu0 %v399
  %v415 = vpop.f32.mrf.mxu0
  %v416 = vadd.f32 %v239, %v415
  %v417 = vpop.f32.mrf.mxu0
  %418 = vdwg.mxu0
  %v419 = vadd.f32 %v369, %v411
  %v420 = vadd.f32 %v370, %v413
  %v421 = vadd.f32 %v371, %v416
  %v422 = vxor.u32 %v419, 2147483648
  %v423 = vxor.u32 %v420, 2147483648
  %v424 = vxor.u32 %v421, 2147483648
  %v425 = vmul.f32 %v422, 1.442695
  %v426 = vpow.pop %v425
  %v427 = vmul.f32 %v423, 1.442695
  %v428 = vpow.pop %v427
  %v429 = vmul.f32 %v424, 1.442695
  %v430 = vpow.pop %v429
  %v431 = vadd.f32 %v426, 1.0
  %v432 = vadd.f32 %v428, 1.0
  %v433 = vadd.f32 %v430, 1.0
  %v434 = vrcp.pop %v431
  %v435 = vmul.f32 %v431, %v434
  %v436 = vsub.f32 1.0, %v435
  %v437 = vmul.f32 %v434, %v436
  %v438 = vadd.f32 %v434, %v437
  %vm439 = vweird.f32 %v431
  %vm440 = vweird.f32 %v434
  %vm441 = vmor %vm439, %vm440
  %v442 = vsel %vm441, %v434, %v438
  %v443 = vand.u32 2147483647, %v431
  %vm444 = vcmp.eq.f32.partialorder %v443, 8.507059e+37
  %v445 = vand.u32 %v431, 2147483648
  %v446 = vor.u32 1.1754944e-38, %v445
  %v447 = vsel %vm444, %v446, %v442
  %v448 = vmul.f32 1.0, %v447
  %v449 = vrcp.pop %v432
  %v450 = vmul.f32 %v432, %v449
  %v451 = vsub.f32 1.0, %v450
  %v452 = vmul.f32 %v449, %v451
  %v453 = vadd.f32 %v449, %v452
  %vm454 = vweird.f32 %v432
  %vm455 = vweird.f32 %v449
  %vm456 = vmor %vm454, %vm455
  %v457 = vsel %vm456, %v449, %v453
  %v458 = vand.u32 2147483647, %v432
  %vm459 = vcmp.eq.f32.partialorder %v458, 8.507059e+37
  %v460 = vand.u32 %v432, 2147483648
  %v461 = vor.u32 1.1754944e-38, %v460
  %v462 = vsel %vm459, %v461, %v457
  %v463 = vmul.f32 1.0, %v462
  %v464 = vrcp.pop %v433
  %v465 = vmul.f32 %v433, %v464
  %v466 = vsub.f32 1.0, %v465
  %v467 = vmul.f32 %v464, %v466
  %v468 = vadd.f32 %v464, %v467
  %vm469 = vweird.f32 %v433
  %vm470 = vweird.f32 %v464
  %vm471 = vmor %vm469, %vm470
  %v472 = vsel %vm471, %v464, %v468
  %v473 = vand.u32 2147483647, %v433
  %vm474 = vcmp.eq.f32.partialorder %v473, 8.507059e+37
  %v475 = vand.u32 %v433, 2147483648
  %v476 = vor.u32 1.1754944e-38, %v475
  %v477 = vsel %vm474, %v476, %v472
  %v478 = vmul.f32 1.0, %v477
  %482 = vrot.lane.b32.xlu0 %v411, 64
  %v483 = vpop.permute.xlu0 %482
  %484 = vrot.lane.b32.xlu0 %v413, 64
  %v485 = vpop.permute.xlu0 %484
  %486 = vrot.lane.b32.xlu0 %v416, 64
  %v487 = vpop.permute.xlu0 %486
  %v491 = vmul.f32 %v448, %v483
  %v492 = vmul.f32 %v463, %v485
  %v493 = vmul.f32 %v478, %v487
  %497 = vrot.lane.b32.xlu0 %v491, 64
  %v498 = vpop.permute.xlu0 %497
  %499 = vrot.lane.b32.xlu0 %v492, 64
  %v500 = vpop.permute.xlu0 %499
  %501 = vrot.lane.b32.xlu0 %v493, 64
  %v502 = vpop.permute.xlu0 %501
  %v506 = vadd.f32 %v369, %v498
  %v507 = vadd.f32 %v370, %v500
  %v508 = vadd.f32 %v371, %v502
  %v509 = vtanh.pop %v506
  %v510 = vtanh.pop %v507
  %v511 = vtanh.pop %v508
  %v512 = vsub.f32 1.0, %v448
  %v513 = vsub.f32 1.0, %v463
  %v514 = vsub.f32 1.0, %v478
  %518 = vrot.lane.b32.xlu0 %v509, 96
  %v519 = vpop.permute.xlu0 %518
  %520 = vrot.lane.b32.xlu0 %v510, 96
  %v521 = vpop.permute.xlu0 %520
  %522 = vrot.lane.b32.xlu0 %v511, 96
  %v523 = vpop.permute.xlu0 %522
  %v527 = vmul.f32 %v512, %v519
  %v528 = vmul.f32 %v513, %v521
  %v529 = vmul.f32 %v514, %v523
  %v530 = vmul.f32 %v448, %v340
  %v531 = vmul.f32 %v463, %v341
  %v532 = vmul.f32 %v478, %v342
  %v533 = vadd.f32 %v527, %v530
  %v534 = vadd.f32 %v528, %v531
  %v535 = vadd.f32 %v529, %v532
  %v536 = vpack.c.bf16 %v534, %v533
  %v537 = vpack.c.bf16 %v535, %v535
  %s538 = scalar_lea.vmem %s7, 2
  %v539 = vld [vmem:[%s538] sm:$0x1]
  %s540 = scalar_lea.vmem %s7, 3
  %v541 = vld [vmem:[%s540] sm:$0x1]
  %s542 = scalar_lea.vmem %s6, 32
  %v543 = vld [vmem:[%s542] sm:$0xf]
  %v544 = vld [vmem:[%s542 + $0x4] sm:$0xf]
  %v545 = vld [vmem:[%s542 + $0x8] sm:$0xf]
  %v546 = vld [vmem:[%s542 + $0xc] sm:$0xf]
  %v551 = vunpack.c.l.b16 %v543
  %v552 = vunpack.c.l.b16 %v544
  %v553 = vunpack.c.l.b16 %v545
  %v554 = vunpack.c.l.b16 %v546
  %v555 = vpack.c.b16 %v552, %v551
  %v556 = vpack.c.b16 %v554, %v553
  %559 = vmatpush.bf16.msra.mxu0 0
  %560 = vmatpush.bf16.msra.mxu0 0
  %561 = vmatpush.bf16.msra.mxu0 0
  %562 = vmatpush.bf16.msra.mxu0 0
  %563 = vmatpush.bf16.msra.mxu0 0
  %564 = vmatpush.bf16.msra.mxu0 0
  %565 = vmatpush.bf16.msra.mxu0 %v556
  %566 = vmatpush.bf16.msra.mxu0 %v555
  %567 = vmatmul.bf16.gmra.mxu0 %v346
  %v568 = vpop.f32.mrf.mxu0
  %v569 = vadd.f32 0.0, %v568
  %v570 = vpop.f32.mrf.mxu0
  %v571 = vadd.f32 0.0, %v570
  %572 = vmatmul.bf16.gmra.mxu0 %v349
  %v573 = vpop.f32.mrf.mxu0
  %v574 = vadd.f32 0.0, %v573
  %v575 = vpop.f32.mrf.mxu0
  %576 = vdwg.mxu0
  %v578 = vperm.slane %v539, 0
  %v580 = vadd.f32 %v578, %v569
  %v581 = vadd.f32 %v578, %v571
  %v582 = vadd.f32 %v578, %v574
  %v584 = vperm.slane %v541, 0
  %v586 = vadd.f32 %v580, %v584
  %v587 = vadd.f32 %v581, %v584
  %v588 = vadd.f32 %v582, %v584
  %v589 = vxor.u32 %v586, 2147483648
  %v590 = vxor.u32 %v587, 2147483648
  %v591 = vxor.u32 %v588, 2147483648
  %v592 = vmul.f32 %v589, 1.442695
  %v593 = vpow.pop %v592
  %v594 = vmul.f32 %v590, 1.442695
  %v595 = vpow.pop %v594
  %v596 = vmul.f32 %v591, 1.442695
  %v597 = vpow.pop %v596
  %v598 = vadd.f32 %v593, 1.0
  %v599 = vadd.f32 %v595, 1.0
  %v600 = vadd.f32 %v597, 1.0
  %v601 = vrcp.pop %v598
  %v602 = vmul.f32 %v598, %v601
  %v603 = vsub.f32 1.0, %v602
  %v604 = vmul.f32 %v601, %v603
  %v605 = vadd.f32 %v601, %v604
  %vm606 = vweird.f32 %v598
  %vm607 = vweird.f32 %v601
  %vm608 = vmor %vm606, %vm607
  %v609 = vsel %vm608, %v601, %v605
  %v610 = vand.u32 2147483647, %v598
  %vm611 = vcmp.eq.f32.partialorder %v610, 8.507059e+37
  %v612 = vand.u32 %v598, 2147483648
  %v613 = vor.u32 1.1754944e-38, %v612
  %v614 = vsel %vm611, %v613, %v609
  %v615 = vmul.f32 1.0, %v614
  %v616 = vrcp.pop %v599
  %v617 = vmul.f32 %v599, %v616
  %v618 = vsub.f32 1.0, %v617
  %v619 = vmul.f32 %v616, %v618
  %v620 = vadd.f32 %v616, %v619
  %vm621 = vweird.f32 %v599
  %vm622 = vweird.f32 %v616
  %vm623 = vmor %vm621, %vm622
  %v624 = vsel %vm623, %v616, %v620
  %v625 = vand.u32 2147483647, %v599
  %vm626 = vcmp.eq.f32.partialorder %v625, 8.507059e+37
  %v627 = vand.u32 %v599, 2147483648
  %v628 = vor.u32 1.1754944e-38, %v627
  %v629 = vsel %vm626, %v628, %v624
  %v630 = vmul.f32 1.0, %v629
  %v631 = vrcp.pop %v600
  %v632 = vmul.f32 %v600, %v631
  %v633 = vsub.f32 1.0, %v632
  %v634 = vmul.f32 %v631, %v633
  %v635 = vadd.f32 %v631, %v634
  %vm636 = vweird.f32 %v600
  %vm637 = vweird.f32 %v631
  %vm638 = vmor %vm636, %vm637
  %v639 = vsel %vm638, %v631, %v635
  %v640 = vand.u32 2147483647, %v600
  %vm641 = vcmp.eq.f32.partialorder %v640, 8.507059e+37
  %v642 = vand.u32 %v600, 2147483648
  %v643 = vor.u32 1.1754944e-38, %v642
  %v644 = vsel %vm641, %v643, %v639
  %v645 = vmul.f32 1.0, %v644
  %646 = vrot.lane.b32.xlu0 %v584, 64
  %v647 = vpop.permute.xlu0 %646
  %v649 = vmul.f32 %v615, %v647
  %v650 = vmul.f32 %v630, %v647
  %v651 = vmul.f32 %v645, %v647
  %655 = vrot.lane.b32.xlu0 %v649, 64
  %v656 = vpop.permute.xlu0 %655
  %657 = vrot.lane.b32.xlu0 %v650, 64
  %v658 = vpop.permute.xlu0 %657
  %659 = vrot.lane.b32.xlu0 %v651, 64
  %v660 = vpop.permute.xlu0 %659
  %v664 = vadd.f32 %v580, %v656
  %v665 = vadd.f32 %v581, %v658
  %v666 = vadd.f32 %v582, %v660
  %v667 = vtanh.pop %v664
  %v668 = vtanh.pop %v665
  %v669 = vtanh.pop %v666
  %v670 = vsub.f32 1.0, %v615
  %v671 = vsub.f32 1.0, %v630
  %v672 = vsub.f32 1.0, %v645
  %676 = vrot.lane.b32.xlu0 %v667, 96
  %v677 = vpop.permute.xlu0 %676
  %678 = vrot.lane.b32.xlu0 %v668, 96
  %v679 = vpop.permute.xlu0 %678
  %680 = vrot.lane.b32.xlu0 %v669, 96
  %v681 = vpop.permute.xlu0 %680
  %v685 = vmul.f32 %v670, %v677
  %v686 = vmul.f32 %v671, %v679
  %v687 = vmul.f32 %v672, %v681
  %v688 = vpack.c.bf16 %v686, %v685
  %v689 = vpack.c.bf16 %v687, %v687
  %690 = vmatpush.bf16.msra.mxu0 0
  %691 = vmatpush.bf16.msra.mxu0 0
  %692 = vmatpush.bf16.msra.mxu0 0
  %693 = vmatpush.bf16.msra.mxu0 0
  %694 = vmatpush.bf16.msra.mxu0 0
  %695 = vmatpush.bf16.msra.mxu0 0
  %696 = vmatpush.bf16.msra.mxu0 %v556
  %697 = vmatpush.bf16.msra.mxu0 %v555
  %698 = vmatmul.bf16.gmra.mxu0 %v209
  %v699 = vpop.f32.mrf.mxu0
  %v700 = vadd.f32 0.0, %v699
  %v701 = vpop.f32.mrf.mxu0
  %v702 = vadd.f32 0.0, %v701
  %703 = vmatmul.bf16.gmra.mxu0 %v212
  %v704 = vpop.f32.mrf.mxu0
  %v705 = vadd.f32 0.0, %v704
  %v706 = vpop.f32.mrf.mxu0
  %707 = vdwg.mxu0
  %v708 = vadd.f32 %v578, %v700
  %v709 = vadd.f32 %v578, %v702
  %v710 = vadd.f32 %v578, %v705
  %s711 = scalar_lea.vmem %s6, 48
  %v712 = vld [vmem:[%s711] sm:$0xf]
  %v713 = vld [vmem:[%s711 + $0x4] sm:$0xf]
  %v714 = vld [vmem:[%s711 + $0x8] sm:$0xf]
  %v715 = vld [vmem:[%s711 + $0xc] sm:$0xf]
  %718 = vrot.lane.b32.xlu0 %v688, 96
  %v719 = vpop.permute.xlu0 %718
  %720 = vrot.lane.b32.xlu0 %v689, 96
  %v721 = vpop.permute.xlu0 %720
  %v726 = vunpack.c.l.b16 %v712
  %v727 = vunpack.c.l.b16 %v713
  %v728 = vunpack.c.l.b16 %v714
  %v729 = vunpack.c.l.b16 %v715
  %v730 = vpack.c.b16 %v727, %v726
  %v731 = vpack.c.b16 %v729, %v728
  %v735 = vsel %vm207, %v719, 0
  %v738 = vsel %vm207, %v721, 0
  %740 = vmatpush.bf16.msra.mxu0 0
  %741 = vmatpush.bf16.msra.mxu0 0
  %742 = vmatpush.bf16.msra.mxu0 0
  %743 = vmatpush.bf16.msra.mxu0 0
  %744 = vmatpush.bf16.msra.mxu0 0
  %745 = vmatpush.bf16.msra.mxu0 0
  %746 = vmatpush.bf16.msra.mxu0 %v731
  %747 = vmatpush.bf16.msra.mxu0 %v730
  %748 = vmatmul.bf16.gmra.mxu0 %v735
  %v749 = vpop.f32.mrf.mxu0
  %v750 = vadd.f32 %v584, %v749
  %v751 = vpop.f32.mrf.mxu0
  %v752 = vadd.f32 %v584, %v751
  %753 = vmatmul.bf16.gmra.mxu0 %v738
  %v754 = vpop.f32.mrf.mxu0
  %v755 = vadd.f32 %v584, %v754
  %v756 = vpop.f32.mrf.mxu0
  %757 = vdwg.mxu0
  %v758 = vadd.f32 %v708, %v750
  %v759 = vadd.f32 %v709, %v752
  %v760 = vadd.f32 %v710, %v755
  %v761 = vxor.u32 %v758, 2147483648
  %v762 = vxor.u32 %v759, 2147483648
  %v763 = vxor.u32 %v760, 2147483648
  %v764 = vmul.f32 %v761, 1.442695
  %v765 = vpow.pop %v764
  %v766 = vmul.f32 %v762, 1.442695
  %v767 = vpow.pop %v766
  %v768 = vmul.f32 %v763, 1.442695
  %v769 = vpow.pop %v768
  %v770 = vadd.f32 %v765, 1.0
  %v771 = vadd.f32 %v767, 1.0
  %v772 = vadd.f32 %v769, 1.0
  %v773 = vrcp.pop %v770
  %v774 = vmul.f32 %v770, %v773
  %v775 = vsub.f32 1.0, %v774
  %v776 = vmul.f32 %v773, %v775
  %v777 = vadd.f32 %v773, %v776
  %vm778 = vweird.f32 %v770
  %vm779 = vweird.f32 %v773
  %vm780 = vmor %vm778, %vm779
  %v781 = vsel %vm780, %v773, %v777
  %v782 = vand.u32 2147483647, %v770
  %vm783 = vcmp.eq.f32.partialorder %v782, 8.507059e+37
  %v784 = vand.u32 %v770, 2147483648
  %v785 = vor.u32 1.1754944e-38, %v784
  %v786 = vsel %vm783, %v785, %v781
  %v787 = vmul.f32 1.0, %v786
  %v788 = vrcp.pop %v771
  %v789 = vmul.f32 %v771, %v788
  %v790 = vsub.f32 1.0, %v789
  %v791 = vmul.f32 %v788, %v790
  %v792 = vadd.f32 %v788, %v791
  %vm793 = vweird.f32 %v771
  %vm794 = vweird.f32 %v788
  %vm795 = vmor %vm793, %vm794
  %v796 = vsel %vm795, %v788, %v792
  %v797 = vand.u32 2147483647, %v771
  %vm798 = vcmp.eq.f32.partialorder %v797, 8.507059e+37
  %v799 = vand.u32 %v771, 2147483648
  %v800 = vor.u32 1.1754944e-38, %v799
  %v801 = vsel %vm798, %v800, %v796
  %v802 = vmul.f32 1.0, %v801
  %v803 = vrcp.pop %v772
  %v804 = vmul.f32 %v772, %v803
  %v805 = vsub.f32 1.0, %v804
  %v806 = vmul.f32 %v803, %v805
  %v807 = vadd.f32 %v803, %v806
  %vm808 = vweird.f32 %v772
  %vm809 = vweird.f32 %v803
  %vm810 = vmor %vm808, %vm809
  %v811 = vsel %vm810, %v803, %v807
  %v812 = vand.u32 2147483647, %v772
  %vm813 = vcmp.eq.f32.partialorder %v812, 8.507059e+37
  %v814 = vand.u32 %v772, 2147483648
  %v815 = vor.u32 1.1754944e-38, %v814
  %v816 = vsel %vm813, %v815, %v811
  %v817 = vmul.f32 1.0, %v816
  %821 = vrot.lane.b32.xlu0 %v750, 64
  %v822 = vpop.permute.xlu0 %821
  %823 = vrot.lane.b32.xlu0 %v752, 64
  %v824 = vpop.permute.xlu0 %823
  %825 = vrot.lane.b32.xlu0 %v755, 64
  %v826 = vpop.permute.xlu0 %825
  %v830 = vmul.f32 %v787, %v822
  %v831 = vmul.f32 %v802, %v824
  %v832 = vmul.f32 %v817, %v826
  %836 = vrot.lane.b32.xlu0 %v830, 64
  %v837 = vpop.permute.xlu0 %836
  %838 = vrot.lane.b32.xlu0 %v831, 64
  %v839 = vpop.permute.xlu0 %838
  %840 = vrot.lane.b32.xlu0 %v832, 64
  %v841 = vpop.permute.xlu0 %840
  %v845 = vadd.f32 %v708, %v837
  %v846 = vadd.f32 %v709, %v839
  %v847 = vadd.f32 %v710, %v841
  %v848 = vtanh.pop %v845
  %v849 = vtanh.pop %v846
  %v850 = vtanh.pop %v847
  %v851 = vsub.f32 1.0, %v787
  %v852 = vsub.f32 1.0, %v802
  %v853 = vsub.f32 1.0, %v817
  %857 = vrot.lane.b32.xlu0 %v848, 96
  %v858 = vpop.permute.xlu0 %857
  %859 = vrot.lane.b32.xlu0 %v849, 96
  %v860 = vpop.permute.xlu0 %859
  %861 = vrot.lane.b32.xlu0 %v850, 96
  %v862 = vpop.permute.xlu0 %861
  %v866 = vmul.f32 %v851, %v858
  %v867 = vmul.f32 %v852, %v860
  %v868 = vmul.f32 %v853, %v862
  %v869 = vmul.f32 %v787, %v685
  %v870 = vmul.f32 %v802, %v686
  %v871 = vmul.f32 %v817, %v687
  %v872 = vadd.f32 %v866, %v869
  %v873 = vadd.f32 %v867, %v870
  %v874 = vadd.f32 %v868, %v871
  %v875 = vpack.c.bf16 %v873, %v872
  %v876 = vpack.c.bf16 %v874, %v874
  %s877 = scalar_lea.vmem %s7, 4
  %v878 = vld [vmem:[%s877] sm:$0x1]
  %s879 = scalar_lea.vmem %s7, 5
  %v880 = vld [vmem:[%s879] sm:$0x1]
  %s881 = scalar_lea.vmem %s6, 64
  %v882 = vld [vmem:[%s881] sm:$0xf]
  %v883 = vld [vmem:[%s881 + $0x4] sm:$0xf]
  %v884 = vld [vmem:[%s881 + $0x8] sm:$0xf]
  %v885 = vld [vmem:[%s881 + $0xc] sm:$0xf]
  %v890 = vunpack.c.l.b16 %v882
  %v891 = vunpack.c.l.b16 %v883
  %v892 = vunpack.c.l.b16 %v884
  %v893 = vunpack.c.l.b16 %v885
  %v894 = vpack.c.b16 %v891, %v890
  %v895 = vpack.c.b16 %v893, %v892
  %898 = vmatpush.bf16.msra.mxu0 0
  %899 = vmatpush.bf16.msra.mxu0 0
  %900 = vmatpush.bf16.msra.mxu0 0
  %901 = vmatpush.bf16.msra.mxu0 0
  %902 = vmatpush.bf16.msra.mxu0 0
  %903 = vmatpush.bf16.msra.mxu0 0
  %904 = vmatpush.bf16.msra.mxu0 %v895
  %905 = vmatpush.bf16.msra.mxu0 %v894
  %906 = vmatmul.bf16.gmra.mxu0 %v396
  %v907 = vpop.f32.mrf.mxu0
  %v908 = vadd.f32 0.0, %v907
  %v909 = vpop.f32.mrf.mxu0
  %v910 = vadd.f32 0.0, %v909
  %911 = vmatmul.bf16.gmra.mxu0 %v399
  %v912 = vpop.f32.mrf.mxu0
  %v913 = vadd.f32 0.0, %v912
  %v914 = vpop.f32.mrf.mxu0
  %915 = vdwg.mxu0
  %v917 = vperm.slane %v878, 0
  %v919 = vadd.f32 %v917, %v908
  %v920 = vadd.f32 %v917, %v910
  %v921 = vadd.f32 %v917, %v913
  %s922 = scalar_lea.vmem %s6, 80
  %v923 = vld [vmem:[%s922] sm:$0xf]
  %v924 = vld [vmem:[%s922 + $0x4] sm:$0xf]
  %v925 = vld [vmem:[%s922 + $0x8] sm:$0xf]
  %v926 = vld [vmem:[%s922 + $0xc] sm:$0xf]
  %929 = vrot.lane.b32.xlu0 %v875, 96
  %v930 = vpop.permute.xlu0 %929
  %931 = vrot.lane.b32.xlu0 %v876, 96
  %v932 = vpop.permute.xlu0 %931
  %v937 = vunpack.c.l.b16 %v923
  %v938 = vunpack.c.l.b16 %v924
  %v939 = vunpack.c.l.b16 %v925
  %v940 = vunpack.c.l.b16 %v926
  %v941 = vpack.c.b16 %v938, %v937
  %v942 = vpack.c.b16 %v940, %v939
  %v946 = vsel %vm207, %v930, 0
  %v949 = vsel %vm207, %v932, 0
  %951 = vmatpush.bf16.msra.mxu0 0
  %952 = vmatpush.bf16.msra.mxu0 0
  %953 = vmatpush.bf16.msra.mxu0 0
  %954 = vmatpush.bf16.msra.mxu0 0
  %955 = vmatpush.bf16.msra.mxu0 0
  %956 = vmatpush.bf16.msra.mxu0 0
  %957 = vmatpush.bf16.msra.mxu0 %v942
  %958 = vmatpush.bf16.msra.mxu0 %v941
  %959 = vmatmul.bf16.gmra.mxu0 %v946
  %v960 = vpop.f32.mrf.mxu0
  %v961 = vadd.f32 0.0, %v960
  %v962 = vpop.f32.mrf.mxu0
  %v963 = vadd.f32 0.0, %v962
  %964 = vmatmul.bf16.gmra.mxu0 %v949
  %v965 = vpop.f32.mrf.mxu0
  %v966 = vadd.f32 0.0, %v965
  %v967 = vpop.f32.mrf.mxu0
  %968 = vdwg.mxu0
  %v969 = vadd.f32 %v919, %v961
  %v970 = vadd.f32 %v920, %v963
  %v971 = vadd.f32 %v921, %v966
  %v973 = vperm.slane %v880, 0
  %v975 = vadd.f32 %v969, %v973
  %v976 = vadd.f32 %v970, %v973
  %v977 = vadd.f32 %v971, %v973
  %v978 = vxor.u32 %v975, 2147483648
  %v979 = vxor.u32 %v976, 2147483648
  %v980 = vxor.u32 %v977, 2147483648
  %v981 = vmul.f32 %v978, 1.442695
  %v982 = vpow.pop %v981
  %v983 = vmul.f32 %v979, 1.442695
  %v984 = vpow.pop %v983
  %v985 = vmul.f32 %v980, 1.442695
  %v986 = vpow.pop %v985
  %v987 = vadd.f32 %v982, 1.0
  %v988 = vadd.f32 %v984, 1.0
  %v989 = vadd.f32 %v986, 1.0
  %v990 = vrcp.pop %v987
  %v991 = vmul.f32 %v987, %v990
  %v992 = vsub.f32 1.0, %v991
  %v993 = vmul.f32 %v990, %v992
  %v994 = vadd.f32 %v990, %v993
  %vm995 = vweird.f32 %v987
  %vm996 = vweird.f32 %v990
  %vm997 = vmor %vm995, %vm996
  %v998 = vsel %vm997, %v990, %v994
  %v999 = vand.u32 2147483647, %v987
  %vm1000 = vcmp.eq.f32.partialorder %v999, 8.507059e+37
  %v1001 = vand.u32 %v987, 2147483648
  %v1002 = vor.u32 1.1754944e-38, %v1001
  %v1003 = vsel %vm1000, %v1002, %v998
  %v1004 = vmul.f32 1.0, %v1003
  %v1005 = vrcp.pop %v988
  %v1006 = vmul.f32 %v988, %v1005
  %v1007 = vsub.f32 1.0, %v1006
  %v1008 = vmul.f32 %v1005, %v1007
  %v1009 = vadd.f32 %v1005, %v1008
  %vm1010 = vweird.f32 %v988
  %vm1011 = vweird.f32 %v1005
  %vm1012 = vmor %vm1010, %vm1011
  %v1013 = vsel %vm1012, %v1005, %v1009
  %v1014 = vand.u32 2147483647, %v988
  %vm1015 = vcmp.eq.f32.partialorder %v1014, 8.507059e+37
  %v1016 = vand.u32 %v988, 2147483648
  %v1017 = vor.u32 1.1754944e-38, %v1016
  %v1018 = vsel %vm1015, %v1017, %v1013
  %v1019 = vmul.f32 1.0, %v1018
  %v1020 = vrcp.pop %v989
  %v1021 = vmul.f32 %v989, %v1020
  %v1022 = vsub.f32 1.0, %v1021
  %v1023 = vmul.f32 %v1020, %v1022
  %v1024 = vadd.f32 %v1020, %v1023
  %vm1025 = vweird.f32 %v989
  %vm1026 = vweird.f32 %v1020
  %vm1027 = vmor %vm1025, %vm1026
  %v1028 = vsel %vm1027, %v1020, %v1024
  %v1029 = vand.u32 2147483647, %v989
  %vm1030 = vcmp.eq.f32.partialorder %v1029, 8.507059e+37
  %v1031 = vand.u32 %v989, 2147483648
  %v1032 = vor.u32 1.1754944e-38, %v1031
  %v1033 = vsel %vm1030, %v1032, %v1028
  %v1034 = vmul.f32 1.0, %v1033
  %1035 = vrot.lane.b32.xlu0 %v973, 64
  %v1036 = vpop.permute.xlu0 %1035
  %v1038 = vmul.f32 %v1004, %v1036
  %v1039 = vmul.f32 %v1019, %v1036
  %v1040 = vmul.f32 %v1034, %v1036
  %1044 = vrot.lane.b32.xlu0 %v1038, 64
  %v1045 = vpop.permute.xlu0 %1044
  %1046 = vrot.lane.b32.xlu0 %v1039, 64
  %v1047 = vpop.permute.xlu0 %1046
  %1048 = vrot.lane.b32.xlu0 %v1040, 64
  %v1049 = vpop.permute.xlu0 %1048
  %v1053 = vadd.f32 %v969, %v1045
  %v1054 = vadd.f32 %v970, %v1047
  %v1055 = vadd.f32 %v971, %v1049
  %v1056 = vtanh.pop %v1053
  %v1057 = vtanh.pop %v1054
  %v1058 = vtanh.pop %v1055
  %v1059 = vsub.f32 1.0, %v1004
  %v1060 = vsub.f32 1.0, %v1019
  %v1061 = vsub.f32 1.0, %v1034
  %1065 = vrot.lane.b32.xlu0 %v1056, 96
  %v1066 = vpop.permute.xlu0 %1065
  %1067 = vrot.lane.b32.xlu0 %v1057, 96
  %v1068 = vpop.permute.xlu0 %1067
  %1069 = vrot.lane.b32.xlu0 %v1058, 96
  %v1070 = vpop.permute.xlu0 %1069
  %v1074 = vmul.f32 %v1059, %v1066
  %v1075 = vmul.f32 %v1060, %v1068
  %v1076 = vmul.f32 %v1061, %v1070
  %s1077 = scalar_lea.vmem %s7, 6
  %v1078 = vld [vmem:[%s1077] sm:$0x1]
  %s1079 = scalar_lea.vmem %s7, 7
  %v1080 = vld [vmem:[%s1079] sm:$0x1]
  %s1081 = scalar_lea.vmem %s6, 112
  %v1082 = vld [vmem:[%s1081] sm:$0xf]
  %v1083 = vld [vmem:[%s1081 + $0x4] sm:$0xf]
  %v1084 = vld [vmem:[%s1081 + $0x8] sm:$0xf]
  %v1085 = vld [vmem:[%s1081 + $0xc] sm:$0xf]
  %1088 = vrot.lane.b32.xlu0 %v536, 96
  %v1089 = vpop.permute.xlu0 %1088
  %1090 = vrot.lane.b32.xlu0 %v537, 96
  %v1091 = vpop.permute.xlu0 %1090
  %v1096 = vunpack.c.l.b16 %v1082
  %v1097 = vunpack.c.l.b16 %v1083
  %v1098 = vunpack.c.l.b16 %v1084
  %v1099 = vunpack.c.l.b16 %v1085
  %v1100 = vpack.c.b16 %v1097, %v1096
  %v1101 = vpack.c.b16 %v1099, %v1098
  %v1105 = vsel %vm207, %v1089, 0
  %v1108 = vsel %vm207, %v1091, 0
  %1110 = vmatpush.bf16.msra.mxu0 0
  %1111 = vmatpush.bf16.msra.mxu0 0
  %1112 = vmatpush.bf16.msra.mxu0 0
  %1113 = vmatpush.bf16.msra.mxu0 0
  %1114 = vmatpush.bf16.msra.mxu0 0
  %1115 = vmatpush.bf16.msra.mxu0 0
  %1116 = vmatpush.bf16.msra.mxu0 %v1101
  %1117 = vmatpush.bf16.msra.mxu0 %v1100
  %1118 = vmatmul.bf16.gmra.mxu0 %v1105
  %v1119 = vpop.f32.mrf.mxu0
  %v1120 = vadd.f32 0.0, %v1119
  %v1121 = vpop.f32.mrf.mxu0
  %v1122 = vadd.f32 0.0, %v1121
  %1123 = vmatmul.bf16.gmra.mxu0 %v1108
  %v1124 = vpop.f32.mrf.mxu0
  %v1125 = vadd.f32 0.0, %v1124
  %v1126 = vpop.f32.mrf.mxu0
  %1127 = vdwg.mxu0
  %v1129 = vperm.slane %v1078, 0
  %v1131 = vadd.f32 %v1129, %v1120
  %v1132 = vadd.f32 %v1129, %v1122
  %v1133 = vadd.f32 %v1129, %v1125
  %s1134 = scalar_lea.vmem %s6, 128
  %v1135 = vld [vmem:[%s1134] sm:$0xf]
  %v1136 = vld [vmem:[%s1134 + $0x4] sm:$0xf]
  %v1137 = vld [vmem:[%s1134 + $0x8] sm:$0xf]
  %v1138 = vld [vmem:[%s1134 + $0xc] sm:$0xf]
  %v1143 = vunpack.c.l.b16 %v1135
  %v1144 = vunpack.c.l.b16 %v1136
  %v1145 = vunpack.c.l.b16 %v1137
  %v1146 = vunpack.c.l.b16 %v1138
  %v1147 = vpack.c.b16 %v1144, %v1143
  %v1148 = vpack.c.b16 %v1146, %v1145
  %1151 = vmatpush.bf16.msra.mxu0 0
  %1152 = vmatpush.bf16.msra.mxu0 0
  %1153 = vmatpush.bf16.msra.mxu0 0
  %1154 = vmatpush.bf16.msra.mxu0 0
  %1155 = vmatpush.bf16.msra.mxu0 0
  %1156 = vmatpush.bf16.msra.mxu0 0
  %1157 = vmatpush.bf16.msra.mxu0 %v1148
  %1158 = vmatpush.bf16.msra.mxu0 %v1147
  %1159 = vmatmul.bf16.gmra.mxu0 %v735
  %v1160 = vpop.f32.mrf.mxu0
  %v1161 = vadd.f32 0.0, %v1160
  %v1162 = vpop.f32.mrf.mxu0
  %v1163 = vadd.f32 0.0, %v1162
  %1164 = vmatmul.bf16.gmra.mxu0 %v738
  %v1165 = vpop.f32.mrf.mxu0
  %v1166 = vadd.f32 0.0, %v1165
  %v1167 = vpop.f32.mrf.mxu0
  %1168 = vdwg.mxu0
  %v1169 = vadd.f32 %v1131, %v1161
  %v1170 = vadd.f32 %v1132, %v1163
  %v1171 = vadd.f32 %v1133, %v1166
  %v1173 = vperm.slane %v1080, 0
  %v1175 = vadd.f32 %v1169, %v1173
  %v1176 = vadd.f32 %v1170, %v1173
  %v1177 = vadd.f32 %v1171, %v1173
  %v1178 = vxor.u32 %v1175, 2147483648
  %v1179 = vxor.u32 %v1176, 2147483648
  %v1180 = vxor.u32 %v1177, 2147483648
  %v1181 = vmul.f32 %v1178, 1.442695
  %v1182 = vpow.pop %v1181
  %v1183 = vmul.f32 %v1179, 1.442695
  %v1184 = vpow.pop %v1183
  %v1185 = vmul.f32 %v1180, 1.442695
  %v1186 = vpow.pop %v1185
  %v1187 = vadd.f32 %v1182, 1.0
  %v1188 = vadd.f32 %v1184, 1.0
  %v1189 = vadd.f32 %v1186, 1.0
  %v1190 = vrcp.pop %v1187
  %v1191 = vmul.f32 %v1187, %v1190
  %v1192 = vsub.f32 1.0, %v1191
  %v1193 = vmul.f32 %v1190, %v1192
  %v1194 = vadd.f32 %v1190, %v1193
  %vm1195 = vweird.f32 %v1187
  %vm1196 = vweird.f32 %v1190
  %vm1197 = vmor %vm1195, %vm1196
  %v1198 = vsel %vm1197, %v1190, %v1194
  %v1199 = vand.u32 2147483647, %v1187
  %vm1200 = vcmp.eq.f32.partialorder %v1199, 8.507059e+37
  %v1201 = vand.u32 %v1187, 2147483648
  %v1202 = vor.u32 1.1754944e-38, %v1201
  %v1203 = vsel %vm1200, %v1202, %v1198
  %v1204 = vmul.f32 1.0, %v1203
  %v1205 = vrcp.pop %v1188
  %v1206 = vmul.f32 %v1188, %v1205
  %v1207 = vsub.f32 1.0, %v1206
  %v1208 = vmul.f32 %v1205, %v1207
  %v1209 = vadd.f32 %v1205, %v1208
  %vm1210 = vweird.f32 %v1188
  %vm1211 = vweird.f32 %v1205
  %vm1212 = vmor %vm1210, %vm1211
  %v1213 = vsel %vm1212, %v1205, %v1209
  %v1214 = vand.u32 2147483647, %v1188
  %vm1215 = vcmp.eq.f32.partialorder %v1214, 8.507059e+37
  %v1216 = vand.u32 %v1188, 2147483648
  %v1217 = vor.u32 1.1754944e-38, %v1216
  %v1218 = vsel %vm1215, %v1217, %v1213
  %v1219 = vmul.f32 1.0, %v1218
  %v1220 = vrcp.pop %v1189
  %v1221 = vmul.f32 %v1189, %v1220
  %v1222 = vsub.f32 1.0, %v1221
  %v1223 = vmul.f32 %v1220, %v1222
  %v1224 = vadd.f32 %v1220, %v1223
  %vm1225 = vweird.f32 %v1189
  %vm1226 = vweird.f32 %v1220
  %vm1227 = vmor %vm1225, %vm1226
  %v1228 = vsel %vm1227, %v1220, %v1224
  %v1229 = vand.u32 2147483647, %v1189
  %vm1230 = vcmp.eq.f32.partialorder %v1229, 8.507059e+37
  %v1231 = vand.u32 %v1189, 2147483648
  %v1232 = vor.u32 1.1754944e-38, %v1231
  %v1233 = vsel %vm1230, %v1232, %v1228
  %v1234 = vmul.f32 1.0, %v1233
  %1235 = vrot.lane.b32.xlu0 %v1173, 64
  %v1236 = vpop.permute.xlu0 %1235
  %v1238 = vmul.f32 %v1204, %v1236
  %v1239 = vmul.f32 %v1219, %v1236
  %v1240 = vmul.f32 %v1234, %v1236
  %1244 = vrot.lane.b32.xlu0 %v1238, 64
  %v1245 = vpop.permute.xlu0 %1244
  %1246 = vrot.lane.b32.xlu0 %v1239, 64
  %v1247 = vpop.permute.xlu0 %1246
  %1248 = vrot.lane.b32.xlu0 %v1240, 64
  %v1249 = vpop.permute.xlu0 %1248
  %v1253 = vadd.f32 %v1169, %v1245
  %v1254 = vadd.f32 %v1170, %v1247
  %v1255 = vadd.f32 %v1171, %v1249
  %v1256 = vtanh.pop %v1253
  %v1257 = vtanh.pop %v1254
  %v1258 = vtanh.pop %v1255
  %v1259 = vsub.f32 1.0, %v1204
  %v1260 = vsub.f32 1.0, %v1219
  %v1261 = vsub.f32 1.0, %v1234
  %1265 = vrot.lane.b32.xlu0 %v1256, 96
  %v1266 = vpop.permute.xlu0 %1265
  %1267 = vrot.lane.b32.xlu0 %v1257, 96
  %v1268 = vpop.permute.xlu0 %1267
  %1269 = vrot.lane.b32.xlu0 %v1258, 96
  %v1270 = vpop.permute.xlu0 %1269
  %v1274 = vmul.f32 %v1259, %v1266
  %v1275 = vmul.f32 %v1260, %v1268
  %v1276 = vmul.f32 %v1261, %v1270
  %v1277 = vpack.c.bf16 %v1275, %v1274
  %v1278 = vpack.c.bf16 %v1276, %v1276
  %1279 = vmatpush.bf16.msra.mxu0 0
  %1280 = vmatpush.bf16.msra.mxu0 0
  %1281 = vmatpush.bf16.msra.mxu0 0
  %1282 = vmatpush.bf16.msra.mxu0 0
  %1283 = vmatpush.bf16.msra.mxu0 0
  %1284 = vmatpush.bf16.msra.mxu0 0
  %1285 = vmatpush.bf16.msra.mxu0 %v1101
  %1286 = vmatpush.bf16.msra.mxu0 %v1100
  %1287 = vmatmul.bf16.gmra.mxu0 %v396
  %v1288 = vpop.f32.mrf.mxu0
  %v1289 = vadd.f32 0.0, %v1288
  %v1290 = vpop.f32.mrf.mxu0
  %v1291 = vadd.f32 0.0, %v1290
  %1292 = vmatmul.bf16.gmra.mxu0 %v399
  %v1293 = vpop.f32.mrf.mxu0
  %v1294 = vadd.f32 0.0, %v1293
  %v1295 = vpop.f32.mrf.mxu0
  %1296 = vdwg.mxu0
  %v1297 = vadd.f32 %v1129, %v1289
  %v1298 = vadd.f32 %v1129, %v1291
  %v1299 = vadd.f32 %v1129, %v1294
  %1300 = vmatpush.bf16.msra.mxu0 0
  %1301 = vmatpush.bf16.msra.mxu0 0
  %1302 = vmatpush.bf16.msra.mxu0 0
  %1303 = vmatpush.bf16.msra.mxu0 0
  %1304 = vmatpush.bf16.msra.mxu0 0
  %1305 = vmatpush.bf16.msra.mxu0 0
  %1306 = vmatpush.bf16.msra.mxu0 %v1148
  %1307 = vmatpush.bf16.msra.mxu0 %v1147
  %1308 = vmatmul.bf16.gmra.mxu0 %v946
  %v1309 = vpop.f32.mrf.mxu0
  %v1310 = vadd.f32 0.0, %v1309
  %v1311 = vpop.f32.mrf.mxu0
  %v1312 = vadd.f32 0.0, %v1311
  %1313 = vmatmul.bf16.gmra.mxu0 %v949
  %v1314 = vpop.f32.mrf.mxu0
  %v1315 = vadd.f32 0.0, %v1314
  %v1316 = vpop.f32.mrf.mxu0
  %1317 = vdwg.mxu0
  %v1318 = vadd.f32 %v1297, %v1310
  %v1319 = vadd.f32 %v1298, %v1312
  %v1320 = vadd.f32 %v1299, %v1315
  %s1321 = scalar_lea.vmem %s6, 144
  %v1322 = vld [vmem:[%s1321] sm:$0xf]
  %v1323 = vld [vmem:[%s1321 + $0x4] sm:$0xf]
  %v1324 = vld [vmem:[%s1321 + $0x8] sm:$0xf]
  %v1325 = vld [vmem:[%s1321 + $0xc] sm:$0xf]
  %1328 = vrot.lane.b32.xlu0 %v1277, 96
  %v1329 = vpop.permute.xlu0 %1328
  %1330 = vrot.lane.b32.xlu0 %v1278, 96
  %v1331 = vpop.permute.xlu0 %1330
  %v1336 = vunpack.c.l.b16 %v1322
  %v1337 = vunpack.c.l.b16 %v1323
  %v1338 = vunpack.c.l.b16 %v1324
  %v1339 = vunpack.c.l.b16 %v1325
  %v1340 = vpack.c.b16 %v1337, %v1336
  %v1341 = vpack.c.b16 %v1339, %v1338
  %v1345 = vsel %vm207, %v1329, 0
  %v1348 = vsel %vm207, %v1331, 0
  %1350 = vmatpush.bf16.msra.mxu0 0
  %1351 = vmatpush.bf16.msra.mxu0 0
  %1352 = vmatpush.bf16.msra.mxu0 0
  %1353 = vmatpush.bf16.msra.mxu0 0
  %1354 = vmatpush.bf16.msra.mxu0 0
  %1355 = vmatpush.bf16.msra.mxu0 0
  %1356 = vmatpush.bf16.msra.mxu0 %v1341
  %1357 = vmatpush.bf16.msra.mxu0 %v1340
  %1358 = vmatmul.bf16.gmra.mxu0 %v1345
  %v1359 = vpop.f32.mrf.mxu0
  %v1360 = vadd.f32 %v1173, %v1359
  %v1361 = vpop.f32.mrf.mxu0
  %v1362 = vadd.f32 %v1173, %v1361
  %1363 = vmatmul.bf16.gmra.mxu0 %v1348
  %v1364 = vpop.f32.mrf.mxu0
  %v1365 = vadd.f32 %v1173, %v1364
  %v1366 = vpop.f32.mrf.mxu0
  %1367 = vdwg.mxu0
  %v1368 = vadd.f32 %v1318, %v1360
  %v1369 = vadd.f32 %v1319, %v1362
  %v1370 = vadd.f32 %v1320, %v1365
  %v1371 = vxor.u32 %v1368, 2147483648
  %v1372 = vxor.u32 %v1369, 2147483648
  %v1373 = vxor.u32 %v1370, 2147483648
  %v1374 = vmul.f32 %v1371, 1.442695
  %v1375 = vpow.pop %v1374
  %v1376 = vmul.f32 %v1372, 1.442695
  %v1377 = vpow.pop %v1376
  %v1378 = vmul.f32 %v1373, 1.442695
  %v1379 = vpow.pop %v1378
  %v1380 = vadd.f32 %v1375, 1.0
  %v1381 = vadd.f32 %v1377, 1.0
  %v1382 = vadd.f32 %v1379, 1.0
  %v1383 = vrcp.pop %v1380
  %v1384 = vmul.f32 %v1380, %v1383
  %v1385 = vsub.f32 1.0, %v1384
  %v1386 = vmul.f32 %v1383, %v1385
  %v1387 = vadd.f32 %v1383, %v1386
  %vm1388 = vweird.f32 %v1380
  %vm1389 = vweird.f32 %v1383
  %vm1390 = vmor %vm1388, %vm1389
  %v1391 = vsel %vm1390, %v1383, %v1387
  %v1392 = vand.u32 2147483647, %v1380
  %vm1393 = vcmp.eq.f32.partialorder %v1392, 8.507059e+37
  %v1394 = vand.u32 %v1380, 2147483648
  %v1395 = vor.u32 1.1754944e-38, %v1394
  %v1396 = vsel %vm1393, %v1395, %v1391
  %v1397 = vmul.f32 1.0, %v1396
  %v1398 = vrcp.pop %v1381
  %v1399 = vmul.f32 %v1381, %v1398
  %v1400 = vsub.f32 1.0, %v1399
  %v1401 = vmul.f32 %v1398, %v1400
  %v1402 = vadd.f32 %v1398, %v1401
  %vm1403 = vweird.f32 %v1381
  %vm1404 = vweird.f32 %v1398
  %vm1405 = vmor %vm1403, %vm1404
  %v1406 = vsel %vm1405, %v1398, %v1402
  %v1407 = vand.u32 2147483647, %v1381
  %vm1408 = vcmp.eq.f32.partialorder %v1407, 8.507059e+37
  %v1409 = vand.u32 %v1381, 2147483648
  %v1410 = vor.u32 1.1754944e-38, %v1409
  %v1411 = vsel %vm1408, %v1410, %v1406
  %v1412 = vmul.f32 1.0, %v1411
  %v1413 = vrcp.pop %v1382
  %v1414 = vmul.f32 %v1382, %v1413
  %v1415 = vsub.f32 1.0, %v1414
  %v1416 = vmul.f32 %v1413, %v1415
  %v1417 = vadd.f32 %v1413, %v1416
  %vm1418 = vweird.f32 %v1382
  %vm1419 = vweird.f32 %v1413
  %vm1420 = vmor %vm1418, %vm1419
  %v1421 = vsel %vm1420, %v1413, %v1417
  %v1422 = vand.u32 2147483647, %v1382
  %vm1423 = vcmp.eq.f32.partialorder %v1422, 8.507059e+37
  %v1424 = vand.u32 %v1382, 2147483648
  %v1425 = vor.u32 1.1754944e-38, %v1424
  %v1426 = vsel %vm1423, %v1425, %v1421
  %v1427 = vmul.f32 1.0, %v1426
  %1431 = vrot.lane.b32.xlu0 %v1360, 64
  %v1432 = vpop.permute.xlu0 %1431
  %1433 = vrot.lane.b32.xlu0 %v1362, 64
  %v1434 = vpop.permute.xlu0 %1433
  %1435 = vrot.lane.b32.xlu0 %v1365, 64
  %v1436 = vpop.permute.xlu0 %1435
  %v1440 = vmul.f32 %v1397, %v1432
  %v1441 = vmul.f32 %v1412, %v1434
  %v1442 = vmul.f32 %v1427, %v1436
  %1446 = vrot.lane.b32.xlu0 %v1440, 64
  %v1447 = vpop.permute.xlu0 %1446
  %1448 = vrot.lane.b32.xlu0 %v1441, 64
  %v1449 = vpop.permute.xlu0 %1448
  %1450 = vrot.lane.b32.xlu0 %v1442, 64
  %v1451 = vpop.permute.xlu0 %1450
  %v1455 = vadd.f32 %v1318, %v1447
  %v1456 = vadd.f32 %v1319, %v1449
  %v1457 = vadd.f32 %v1320, %v1451
  %v1458 = vtanh.pop %v1455
  %v1459 = vtanh.pop %v1456
  %v1460 = vtanh.pop %v1457
  %v1461 = vsub.f32 1.0, %v1397
  %v1462 = vsub.f32 1.0, %v1412
  %v1463 = vsub.f32 1.0, %v1427
  %1467 = vrot.lane.b32.xlu0 %v1458, 96
  %v1468 = vpop.permute.xlu0 %1467
  %1469 = vrot.lane.b32.xlu0 %v1459, 96
  %v1470 = vpop.permute.xlu0 %1469
  %1471 = vrot.lane.b32.xlu0 %v1460, 96
  %v1472 = vpop.permute.xlu0 %1471
  %v1476 = vmul.f32 %v1461, %v1468
  %v1477 = vmul.f32 %v1462, %v1470
  %v1478 = vmul.f32 %v1463, %v1472
  %v1479 = vmul.f32 %v1397, %v1274
  %v1480 = vmul.f32 %v1412, %v1275
  %v1481 = vmul.f32 %v1427, %v1276
  %v1482 = vadd.f32 %v1476, %v1479
  %v1483 = vadd.f32 %v1477, %v1480
  %v1484 = vadd.f32 %v1478, %v1481
  %s1485 = scalar_lea.vmem %s8, 1
  %v1486 = vld [vmem:[%s1485] sm:$0x1]
  %v1488 = vperm.slane %v1486, 0
  %1489 = vrot.lane.b32.xlu0 %v1488, 32
  %v1490 = vpop.permute.xlu0 %1489
  %v1492 = vmul.f32 %v1074, %v1490
  %v1493 = vmul.f32 %v1075, %v1490
  %v1494 = vmul.f32 %v1076, %v1490
  %s1495 = scalar_lea.vmem %s8, 2
  %v1496 = vld [vmem:[%s1495] sm:$0x1]
  %v1498 = vperm.slane %v1496, 0
  %1499 = vrot.lane.b32.xlu0 %v1498, 32
  %v1500 = vpop.permute.xlu0 %1499
  %v1502 = vmul.f32 %v1482, %v1500
  %v1503 = vmul.f32 %v1483, %v1500
  %v1504 = vmul.f32 %v1484, %v1500
  %v1505 = vadd.f32 %v1492, %v1502
  %v1506 = vadd.f32 %v1493, %v1503
  %v1507 = vadd.f32 %v1494, %v1504
  %s1508 = scalar_lea.vmem %s8, 4
  %v1509 = vld [vmem:[%s1508] sm:$0x1]
  %v1511 = vperm.slane %v1509, 0
  %1512 = vrot.lane.b32.xlu0 %v1511, 32
  %v1513 = vpop.permute.xlu0 %1512
  %v1515 = vadd.f32 %v1505, %v1513
  %v1516 = vadd.f32 %v1506, %v1513
  %v1517 = vadd.f32 %v1507, %v1513
  %1521 = vrot.lane.b32.xlu0 %v1515, 96
  %v1522 = vpop.permute.xlu0 %1521
  %1523 = vrot.lane.b32.xlu0 %v1516, 96
  %v1524 = vpop.permute.xlu0 %1523
  %1525 = vrot.lane.b32.xlu0 %v1517, 96
  %v1526 = vpop.permute.xlu0 %1525
  %v1530 = vsel %vm207, %v1522, 0.0
  %1531 = vadd.xlane.f32.xlu0 %v1530
  %v1532 = vpop.xlane.xlu0 %1531
  %v1533 = vsel %vm207, %v1524, 0.0
  %1534 = vadd.xlane.f32.xlu0 %v1533
  %v1535 = vpop.xlane.xlu0 %1534
  %v1536 = vsel %vm207, %v1526, 0.0
  %1537 = vadd.xlane.f32.xlu0 %v1536
  %v1538 = vpop.xlane.xlu0 %1537
  %v1539 = vmul.f32 %v1532, 0.5
  %v1540 = vmul.f32 %v1535, 0.5
  %v1541 = vmul.f32 %v1538, 0.5
  %v1542 = vmul.f32 %v1532, %v1532
  %v1543 = vmul.f32 %v1535, %v1535
  %v1544 = vmul.f32 %v1538, %v1538
  %v1545 = vmul.f32 %v1542, %v1532
  %v1546 = vmul.f32 %v1543, %v1535
  %v1547 = vmul.f32 %v1544, %v1538
  %v1548 = vmul.f32 %v1545, 0.044715
  %v1549 = vmul.f32 %v1546, 0.044715
  %v1550 = vmul.f32 %v1547, 0.044715
  %v1551 = vadd.f32 %v1532, %v1548
  %v1552 = vadd.f32 %v1535, %v1549
  %v1553 = vadd.f32 %v1538, %v1550
  %v1554 = vmul.f32 %v1551, 0.7978846
  %v1555 = vmul.f32 %v1552, 0.7978846
  %v1556 = vmul.f32 %v1553, 0.7978846
  %v1557 = vtanh.pop %v1554
  %v1558 = vtanh.pop %v1555
  %v1559 = vtanh.pop %v1556
  %v1560 = vadd.f32 %v1557, 1.0
  %v1561 = vadd.f32 %v1558, 1.0
  %v1562 = vadd.f32 %v1559, 1.0
  %v1563 = vmul.f32 %v1539, %v1560
  %v1564 = vmul.f32 %v1540, %v1561
  %v1565 = vmul.f32 %v1541, %v1562
  %v1566 = vld [vmem:[%s5] sm:$0xff]
  %vm1567 = vcmp.gt.f32.partialorder %v106, 0.0
  %vm1568 = vcmp.gt.f32.partialorder %v107, 0.0
  %vm1569 = vcmp.gt.f32.partialorder %v108, 0.0
  %v1570 = vsel %vm1567, %v1563, -1e+30
  %v1571 = vsel %vm1568, %v1564, -1e+30
  %v1572 = vsel %vm1569, %v1565, -1e+30
  %v1573 = vsel %vm109, %v1570, -inf
  %v1574 = vsel %vm109, %v1571, -inf
  %v1575 = vsel %vm109, %v1572, -inf
  %v1576 = vmax.f32 %v1573, %v1574
  %v1577 = vmax.f32 %v1576, %v1575
  %v1578 = vrot.slane %v1577, 4
  %v1579 = vmax.f32 %v1577, %v1578
  %v1580 = vrot.slane %v1579, 2
  %v1581 = vmax.f32 %v1579, %v1580
  %v1582 = vrot.slane %v1581, 1
  %v1583 = vmax.f32 %v1581, %v1582
  %v1584 = vmul.f32 %v106, %v1583
  %v1585 = vmul.f32 %v107, %v1583
  %v1586 = vmul.f32 %v108, %v1583
  %v1587 = vsel %vm109, %v1584, 0.0
  %1588 = vadd.xlane.f32.xlu0 %v1587
  %v1589 = vpop.xlane.xlu0 %1588
  %v1590 = vsel %vm109, %v1585, 0.0
  %1591 = vadd.xlane.f32.xlu0 %v1590
  %v1592 = vpop.xlane.xlu0 %1591
  %v1593 = vsel %vm109, %v1586, 0.0
  %1594 = vadd.xlane.f32.xlu0 %v1593
  %v1595 = vpop.xlane.xlu0 %1594
  %v1596 = vsub.f32 %v1563, %v1589
  %v1597 = vsub.f32 %v1564, %v1592
  %v1598 = vsub.f32 %v1565, %v1595
  %v1599 = vmul.f32 %v1596, 1.442695
  %v1600 = vpow.pop %v1599
  %v1601 = vmul.f32 %v1597, 1.442695
  %v1602 = vpow.pop %v1601
  %v1603 = vmul.f32 %v1598, 1.442695
  %v1604 = vpow.pop %v1603
  %vm1605 = vcmask 195584
  %v1607 = vsel %vm1605, %v1566, 0
  %1609 = vmatpush.msra.mxu0 0.0
  %1610 = vmatpush.msra.mxu0 0.0
  %1611 = vmatpush.msra.mxu0 0.0
  %1612 = vmatpush.msra.mxu0 0.0
  %1613 = vmatpush.msra.mxu0 0.0
  %1614 = vmatpush.msra.mxu0 0.0
  %1615 = vmatpush.msra.mxu0 0.0
  %1616 = vmatpush.msra.mxu0 0.0
  %1617 = vmatpush.msra.mxu0 0.0
  %1618 = vmatpush.msra.mxu0 0.0
  %1619 = vmatpush.msra.mxu0 0.0
  %1620 = vmatpush.msra.mxu0 0.0
  %1621 = vmatpush.msra.mxu0 0.0
  %1622 = vmatpush.msra.mxu0 %v1604
  %1623 = vmatpush.msra.mxu0 %v1602
  %1624 = vmatpush.msra.mxu0 %v1600
  %1625 = vmatmul.f32.gmra.mxu0 %v1607
  %v1626 = vpop.f32.mrf.mxu0
  %v1627 = vadd.f32 0.0, %v1626
  %1628 = vdwg.mxu0
  %1629 = vmatpush.msra.mxu0 0.0
  %1630 = vmatpush.msra.mxu0 0.0
  %1631 = vmatpush.msra.mxu0 0.0
  %1632 = vmatpush.msra.mxu0 0.0
  %1633 = vmatpush.msra.mxu0 0.0
  %1634 = vmatpush.msra.mxu0 0.0
  %1635 = vmatpush.msra.mxu0 0.0
  %1636 = vmatpush.msra.mxu0 0.0
  %1637 = vmatpush.msra.mxu0 0.0
  %1638 = vmatpush.msra.mxu0 0.0
  %1639 = vmatpush.msra.mxu0 0.0
  %1640 = vmatpush.msra.mxu0 0.0
  %1641 = vmatpush.msra.mxu0 0.0
  %1642 = vmatpush.msra.mxu0 0.0
  %1643 = vmatpush.msra.mxu0 0.0
  %1644 = vmatpush.msra.mxu0 %v1627
  %1645 = vmatmul.f32.gmra.mxu0 %v111
  %v1646 = vpop.f32.mrf.mxu0
  %v1647 = vadd.f32 0.0, %v1646
  %1648 = vmatmul.f32.gmra.mxu0 %v114
  %v1649 = vpop.f32.mrf.mxu0
  %v1650 = vadd.f32 0.0, %v1649
  %1651 = vmatmul.f32.gmra.mxu0 %v117
  %v1652 = vpop.f32.mrf.mxu0
  %v1653 = vadd.f32 0.0, %v1652
  %1654 = vdwg.mxu0
  %v1655 = vrcp.pop %v1647
  %v1656 = vrcp.pop %v1650
  %v1657 = vrcp.pop %v1653
  %v1658 = vmul.f32 %v1600, %v1655
  %v1659 = vmul.f32 %v1602, %v1656
  %v1660 = vmul.f32 %v1604, %v1657
  %v1661 = vld [vmem:[%s1] sm:$0xff]
  %v1662 = vld [vmem:[%s1 + $0x8] sm:$0xff]
  %v1663 = vld [vmem:[%s1 + $0x10] sm:$0xff]
  %v1664 = vadd.f32 %v1563, %v1661
  %v1665 = vadd.f32 %v1564, %v1662
  %v1666 = vadd.f32 %v1565, %v1663
  %v1667 = vmul.f32 %v1664, 10.0
  %v1668 = vmul.f32 %v1665, 10.0
  %v1669 = vmul.f32 %v1666, 10.0
  %1671 = vset.pattern.permute.xlu0 0
  %1672 = vperm.xlu0 %1671, %v1667
  %v1673 = vpop.permute.xlu0 %1672
  %1676 = vset.pattern.permute.xlu0 0
  %1677 = vperm.xlu0 %1676, %v1668
  %v1678 = vpop.permute.xlu0 %1677
  %1681 = vset.pattern.permute.xlu0 0
  %1682 = vperm.xlu0 %1681, %v1669
  %v1683 = vpop.permute.xlu0 %1682
  %v1685 = vsel %vm1567, %v1673, -1e+30
  %v1686 = vsel %vm1568, %v1678, -1e+30
  %v1687 = vsel %vm1569, %v1683, -1e+30
  %v1688 = vsel %vm109, %v1685, -inf
  %v1689 = vsel %vm109, %v1686, -inf
  %v1690 = vsel %vm109, %v1687, -inf
  %v1691 = vmax.f32 %v1688, %v1689
  %v1692 = vmax.f32 %v1691, %v1690
  %v1693 = vrot.slane %v1692, 4
  %v1694 = vmax.f32 %v1692, %v1693
  %v1695 = vrot.slane %v1694, 2
  %v1696 = vmax.f32 %v1694, %v1695
  %v1697 = vrot.slane %v1696, 1
  %v1698 = vmax.f32 %v1696, %v1697
  %v1699 = vmul.f32 %v106, %v1698
  %v1700 = vmul.f32 %v107, %v1698
  %v1701 = vmul.f32 %v108, %v1698
  %v1702 = vsel %vm109, %v1699, 0.0
  %1703 = vadd.xlane.f32.xlu0 %v1702
  %v1704 = vpop.xlane.xlu0 %1703
  %v1705 = vsel %vm109, %v1700, 0.0
  %1706 = vadd.xlane.f32.xlu0 %v1705
  %v1707 = vpop.xlane.xlu0 %1706
  %v1708 = vsel %vm109, %v1701, 0.0
  %1709 = vadd.xlane.f32.xlu0 %v1708
  %v1710 = vpop.xlane.xlu0 %1709
  %v1711 = vsub.f32 %v1667, %v1704
  %v1712 = vsub.f32 %v1668, %v1707
  %v1713 = vsub.f32 %v1669, %v1710
  %v1714 = vmul.f32 %v1711, 1.442695
  %v1715 = vpow.pop %v1714
  %v1716 = vmul.f32 %v1712, 1.442695
  %v1717 = vpow.pop %v1716
  %v1718 = vmul.f32 %v1713, 1.442695
  %v1719 = vpow.pop %v1718
  %1720 = vmatpush.msra.mxu0 0.0
  %1721 = vmatpush.msra.mxu0 0.0
  %1722 = vmatpush.msra.mxu0 0.0
  %1723 = vmatpush.msra.mxu0 0.0
  %1724 = vmatpush.msra.mxu0 0.0
  %1725 = vmatpush.msra.mxu0 0.0
  %1726 = vmatpush.msra.mxu0 0.0
  %1727 = vmatpush.msra.mxu0 0.0
  %1728 = vmatpush.msra.mxu0 0.0
  %1729 = vmatpush.msra.mxu0 0.0
  %1730 = vmatpush.msra.mxu0 0.0
  %1731 = vmatpush.msra.mxu0 0.0
  %1732 = vmatpush.msra.mxu0 0.0
  %1733 = vmatpush.msra.mxu0 %v1719
  %1734 = vmatpush.msra.mxu0 %v1717
  %1735 = vmatpush.msra.mxu0 %v1715
  %1736 = vmatmul.f32.gmra.mxu0 %v1607
  %v1737 = vpop.f32.mrf.mxu0
  %v1738 = vadd.f32 0.0, %v1737
  %1739 = vdwg.mxu0
  %1740 = vmatpush.msra.mxu0 0.0
  %1741 = vmatpush.msra.mxu0 0.0
  %1742 = vmatpush.msra.mxu0 0.0
  %1743 = vmatpush.msra.mxu0 0.0
  %1744 = vmatpush.msra.mxu0 0.0
  %1745 = vmatpush.msra.mxu0 0.0
  %1746 = vmatpush.msra.mxu0 0.0
  %1747 = vmatpush.msra.mxu0 0.0
  %1748 = vmatpush.msra.mxu0 0.0
  %1749 = vmatpush.msra.mxu0 0.0
  %1750 = vmatpush.msra.mxu0 0.0
  %1751 = vmatpush.msra.mxu0 0.0
  %1752 = vmatpush.msra.mxu0 0.0
  %1753 = vmatpush.msra.mxu0 0.0
  %1754 = vmatpush.msra.mxu0 0.0
  %1755 = vmatpush.msra.mxu0 %v1738
  %1756 = vmatmul.f32.gmra.mxu0 %v111
  %v1757 = vpop.f32.mrf.mxu0
  %v1758 = vadd.f32 0.0, %v1757
  %1759 = vmatmul.f32.gmra.mxu0 %v114
  %v1760 = vpop.f32.mrf.mxu0
  %v1761 = vadd.f32 0.0, %v1760
  %1762 = vmatmul.f32.gmra.mxu0 %v117
  %v1763 = vpop.f32.mrf.mxu0
  %v1764 = vadd.f32 0.0, %v1763
  %1765 = vdwg.mxu0
  %v1766 = vrcp.pop %v1758
  %v1767 = vrcp.pop %v1761
  %v1768 = vrcp.pop %v1764
  %v1769 = vmul.f32 %v1715, %v1766
  %v1770 = vmul.f32 %v1717, %v1767
  %v1771 = vmul.f32 %v1719, %v1768
  %v1772 = vmul.f32 %v1658, %v1769
  %v1773 = vmul.f32 %v1659, %v1770
  %v1774 = vmul.f32 %v1660, %v1771
  %s1775 = scalar_lea.vmem %s5, 8
  %v1776 = vld [vmem:[%s1775] sm:$0xff]
  %1778 = vset.pattern.permute.xlu0 0
  %1779 = vperm.xlu0 %1778, %v1772
  %v1780 = vpop.permute.xlu0 %1779
  %1783 = vset.pattern.permute.xlu0 0
  %1784 = vperm.xlu0 %1783, %v1773
  %v1785 = vpop.permute.xlu0 %1784
  %1788 = vset.pattern.permute.xlu0 0
  %1789 = vperm.xlu0 %1788, %v1774
  %v1790 = vpop.permute.xlu0 %1789
  %v1792 = vmul.f32 %v1780, %v137
  %v1793 = vmul.f32 %v1785, %v140
  %v1794 = vmul.f32 %v1790, %v143
  %v1796 = vsel %vm1605, %v1776, 0
  %1798 = vmatpush.msra.mxu0 0.0
  %1799 = vmatpush.msra.mxu0 0.0
  %1800 = vmatpush.msra.mxu0 0.0
  %1801 = vmatpush.msra.mxu0 0.0
  %1802 = vmatpush.msra.mxu0 0.0
  %1803 = vmatpush.msra.mxu0 0.0
  %1804 = vmatpush.msra.mxu0 0.0
  %1805 = vmatpush.msra.mxu0 0.0
  %1806 = vmatpush.msra.mxu0 0.0
  %1807 = vmatpush.msra.mxu0 0.0
  %1808 = vmatpush.msra.mxu0 0.0
  %1809 = vmatpush.msra.mxu0 0.0
  %1810 = vmatpush.msra.mxu0 0.0
  %1811 = vmatpush.msra.mxu0 %v1794
  %1812 = vmatpush.msra.mxu0 %v1793
  %1813 = vmatpush.msra.mxu0 %v1792
  %1814 = vmatmul.f32.gmra.mxu0 %v1796
  %v1815 = vpop.f32.mrf.mxu0
  %v1816 = vadd.f32 0.0, %v1815
  %1817 = vdwg.mxu0
  %v1818 = vpack.c.bf16 %v1816, %v1816
  %v1819 = vld [vmem:[%s10] sm:$0xf]
  %v1820 = vld [vmem:[%s10 + $0x4] sm:$0xf]
  %v1821 = vld [vmem:[%s10 + $0x8] sm:$0xf]
  %v1822 = vld [vmem:[%s10 + $0xc] sm:$0xf]
  %v1827 = vunpack.c.l.b16 %v1819
  %v1828 = vunpack.c.l.b16 %v1820
  %v1829 = vunpack.c.l.b16 %v1821
  %v1830 = vunpack.c.l.b16 %v1822
  %v1831 = vpack.c.b16 %v1828, %v1827
  %v1832 = vpack.c.b16 %v1830, %v1829
  %v1836 = vsel %vm207, %v1818, 0
  %1838 = vmatpush.bf16.msra.mxu0 0
  %1839 = vmatpush.bf16.msra.mxu0 0
  %1840 = vmatpush.bf16.msra.mxu0 0
  %1841 = vmatpush.bf16.msra.mxu0 0
  %1842 = vmatpush.bf16.msra.mxu0 0
  %1843 = vmatpush.bf16.msra.mxu0 0
  %1844 = vmatpush.bf16.msra.mxu0 %v1832
  %1845 = vmatpush.bf16.msra.mxu0 %v1831
  %1846 = vmatmul.bf16.gmra.mxu0 %v1836
  %v1847 = vpop.f32.mrf.mxu0
  %v1848 = vadd.f32 0.0, %v1847
  %v1849 = vpop.f32.mrf.mxu0
  %1850 = vdwg.mxu0
  %v1851 = vld [vmem:[%s9] sm:$0xf]
  %v1852 = vpack.c.bf16 %v1848, %v1848
  %s1853 = scalar_lea.vmem %s8, 3
  %v1854 = vld [vmem:[%s1853] sm:$0x1]
  %v1856 = vperm.slane %v1854, 0
  %v1859 = vsel %vm109, %v1851, 0
  %vm1861 = vcmask 1043456
  %v1863 = vsel %vm1861, %v1852, 0
  %1865 = vmatpush.bf16.msra.mxu0 0
  %1866 = vmatpush.bf16.msra.mxu0 0
  %1867 = vmatpush.bf16.msra.mxu0 0
  %1868 = vmatpush.bf16.msra.mxu0 0
  %1869 = vmatpush.bf16.msra.mxu0 0
  %1870 = vmatpush.bf16.msra.mxu0 0
  %1871 = vmatpush.bf16.msra.mxu0 0
  %1872 = vmatpush.bf16.msra.mxu0 %v1863
  %1873 = vmatmul.bf16.gmra.mxu0 %v1859
  %v1874 = vpop.f32.mrf.mxu0
  %v1875 = vadd.f32 %v1856, %v1874
  %v1876 = vpop.f32.mrf.mxu0
  %1877 = vdwg.mxu0
  %v1878 = vmul.f32 %v1875, 0.5
  %v1879 = vmul.f32 %v1875, %v1875
  %v1880 = vmul.f32 %v1879, %v1875
  %v1881 = vmul.f32 %v1880, 0.044715
  %v1882 = vadd.f32 %v1875, %v1881
  %v1883 = vmul.f32 %v1882, 0.7978846
  %v1884 = vtanh.pop %v1883
  %v1885 = vadd.f32 %v1884, 1.0
  %v1886 = vmul.f32 %v1878, %v1885
  %v1887 = vld [vmem:[%s11] sm:$0xff]
  %v1888 = vmul.f32 %v1886, %v1887
  %s1889 = scalar_lea.vmem %s8, 5
  %v1890 = vld [vmem:[%s1889] sm:$0x1]
  %v1892 = vperm.slane %v1890, 0
  %v1894 = vadd.f32 %v1888, %v1892
  %v1895 = vsel %vm207, %v1894, 0.0
  %1896 = vadd.xlane.f32.xlu0 %v1895
  %v1897 = vpop.xlane.xlu0 %1896
  %v1898 = vld [vmem:[%s12] sm:$0x3]
  %v1900 = vsel %vm109, %v1898, 0
  %1902 = vmatpush.msra.mxu0 0.0
  %1903 = vmatpush.msra.mxu0 0.0
  %1904 = vmatpush.msra.mxu0 0.0
  %1905 = vmatpush.msra.mxu0 0.0
  %1906 = vmatpush.msra.mxu0 0.0
  %1907 = vmatpush.msra.mxu0 0.0
  %1908 = vmatpush.msra.mxu0 0.0
  %1909 = vmatpush.msra.mxu0 0.0
  %1910 = vmatpush.msra.mxu0 0.0
  %1911 = vmatpush.msra.mxu0 0.0
  %1912 = vmatpush.msra.mxu0 0.0
  %1913 = vmatpush.msra.mxu0 0.0
  %1914 = vmatpush.msra.mxu0 0.0
  %1915 = vmatpush.msra.mxu0 0.0
  %1916 = vmatpush.msra.mxu0 0.0
  %1917 = vmatpush.msra.mxu0 %v1897
  %1918 = vmatmul.f32.gmra.mxu0 %v1900
  %v1919 = vpop.f32.mrf.mxu0
  %v1920 = vadd.f32 0.0, %v1919
  %1921 = vdwg.mxu0
  %vm1922 = vcmask 1024
  %1923 = vst.msk [vmem:[%s13] sm:$0x3] %vm1922, %v1920
  // Predicated region
  $region54: #{ga_ac_forward.1} parent=0 // pred_check
    _
  $region55: #{ga_ac_forward.1} parent=0 // pred_check_branch
    %1925 = sbr.rel (0) target = $region57
  $region56: #{ga_ac_forward.1} parent=0 // pred_region
    _
  $region57: #{ga_ac_forward.1} parent=0 // pred_fallthru
    _
  // Predicated region
  $region58: #{ga_ac_forward.1} parent=0 // pred_check
    _
  $region59: #{ga_ac_forward.1} parent=0 // pred_check_branch
    %1927 = sbr.rel (0) target = $region61
  $region60: #{ga_ac_forward.1} parent=0 // pred_region
    _
  $region61: #{ga_ac_forward.1} parent=0 // pred_fallthru
    _

</llo_original>
